<compile_context>
chip_gen: v6e
topology: v6e:2x2x1
jax: 0.10.0
libtpu: 0.0.40
codegen_flags: <defaults>
</compile_context>

<pallas_src>
import jax
import jax.numpy as jnp
from jax.experimental import pallas as pl
from jax.experimental.pallas import tpu as pltpu

F = 64                      # num_res_ft
NUM_RES = 2                 # ResBlocks per res_body
NUM_BODIES = 3              # res_body_1 / 2 / 3
N_LAYERS = NUM_BODIES * NUM_RES * 2          # 12 conv+BN+ReLU layers in ResBlocks
N_CONVS = N_LAYERS + 1                       # + initial conv
RRELU_SLOPE = (1.0 / 8.0 + 1.0 / 3.0) / 2.0  # nn.RReLU eval-mode slope = 11/48
BN_EPS = 1e-5


def rrcnn_kernel(x_ref, wb_ref, fcw_ref, fcb_ref, out_ref):
    x = x_ref[...]                                                # (L, F) f32
    L = x.shape[0]

    # --- boundary masks for the zero-padded k=3 conv, hoisted (reused 13x) ---
    row = jax.lax.broadcasted_iota(jnp.int32, (L, 1), 0)
    mask_up = (row > 0).astype(jnp.float32)        # zeroes wrapped row of x[l-1]
    mask_dn = (row < L - 1).astype(jnp.float32)    # zeroes wrapped row of x[l+1]

    def conv3(h, layer):
        """Fused 3-tap conv: one (L, 3F) x (3F, F) matmul + folded bias."""
        hm = pltpu.roll(h, shift=1, axis=0) * mask_up        # h[l-1], zero-padded
        hp = pltpu.roll(h, shift=L - 1, axis=0) * mask_dn    # h[l+1], zero-padded
        hcat = jnp.concatenate([hm, h, hp], axis=1)          # (L, 3F)
        wl = wb_ref[layer]                                   # (3F+1, F)
        w = wl[0:3 * F, :]                                   # (3F, F)
        b = wl[3 * F:3 * F + 1, :]                           # (1, F) folded bias
        return jnp.dot(hcat, w, preferred_element_type=jnp.float32) + b

    def rrelu(h):
        return jnp.where(h >= 0.0, h, RRELU_SLOPE * h)

    # initial conv (no BN / activation in RRCNN_C.forward)
    x_in = conv3(x, 0)

    h = x_in
    skip = x_in
    layer = 1
    for _body in range(NUM_BODIES):
        for _ in range(NUM_RES):                  # ResBlock followed by RReLU
            r = h
            for _ in range(2):                    # conv + (folded BN) + ReLU, twice
                r = jnp.maximum(conv3(r, layer), 0.0)
                layer += 1
            h = rrelu(r + h)                      # residual add, then RReLU
        h = h + skip                              # x + x_in / x1 / x2
        skip = h

    # AdaptiveAvgPool1d(1) -> flatten -> Linear -> Softmax
    pooled = jnp.mean(h, axis=0, keepdims=True)                    # (1, F)
    # FC on the VPU: broadcast-multiply + lane reduce (no 1-row MXU dot).
    logits = jnp.sum(fcw_ref[...] * pooled, axis=1, keepdims=True) + fcb_ref[...]
    m = jnp.max(logits, axis=0, keepdims=True)                     # (C, 1)
    e = jnp.exp(logits - m)
    inv = pl.reciprocal(jnp.sum(e, axis=0, keepdims=True), approx=True)
    out_ref[...] = e * inv                                         # (C, 1)


def rrcnn_forward(x_ncl, params):
    """x_ncl: (1, C_in, L) float32 (NCL, batch must be 1)."""
    n, c_in, L = x_ncl.shape
    assert n == 1, "torch.flatten + Linear in the reference implies batch=1"
    x = jnp.transpose(x_ncl[0], (1, 0))                            # (L, C_in)
    x = jnp.pad(x, ((0, 0), (0, F - c_in)))                        # (L, F)

    wb, fcw, fcb = params
    num_classes = fcw.shape[0]

    out = pl.pallas_call(
        rrcnn_kernel,
        out_shape=jax.ShapeDtypeStruct((num_classes, 1), jnp.float32),
        in_specs=[pl.BlockSpec(memory_space=pltpu.MemorySpace.VMEM)] * 4,
        out_specs=pl.BlockSpec(memory_space=pltpu.MemorySpace.VMEM),
    )(x, wb, fcw, fcb)
    return out[:, 0]                                               # (num_classes,)


def init_params(key, num_channels, num_classes):
    """Deterministic synthetic torch-layout parameters, folded for the kernel."""
    ks = jax.random.split(key, 10)

    # ---- raw parameters in PyTorch layouts ----
    w0_t = jax.random.normal(ks[0], (F, num_channels, 3), jnp.float32) * 0.1
    b0_t = jax.random.normal(ks[1], (F,), jnp.float32) * 0.1
    w_t = jax.random.normal(ks[2], (N_LAYERS, F, F, 3), jnp.float32) * 0.05
    b_t = jax.random.normal(ks[3], (N_LAYERS, F), jnp.float32) * 0.05
    gamma = 1.0 + 0.1 * jax.random.normal(ks[4], (N_LAYERS, F), jnp.float32)
    beta = 0.1 * jax.random.normal(ks[5], (N_LAYERS, F), jnp.float32)
    r_mean = 0.1 * jax.random.normal(ks[6], (N_LAYERS, F), jnp.float32)
    r_var = 1.0 + 0.1 * jnp.abs(jax.random.normal(ks[7], (N_LAYERS, F), jnp.float32))
    fcw_t = jax.random.normal(ks[8], (num_classes, F), jnp.float32) * 0.1
    fcb_t = jax.random.normal(ks[9], (num_classes,), jnp.float32) * 0.1

    # ---- fold & repack for the kernel ----
    # initial conv: (F_out, C_in, 3) -> tap-major (3, C_in, F_out), pad C_in->F,
    # flatten taps -> (3F, F).  No BN on this layer.
    w0 = jnp.transpose(w0_t, (2, 1, 0))                            # (3, C_in, F)
    w0 = jnp.pad(w0, ((0, 0), (0, F - num_channels), (0, 0)))      # (3, F, F)
    w0cat = w0.reshape(3 * F, F)
    b0 = b0_t.reshape(1, F)

    # ResBlock convs: fold eval-mode BatchNorm + conv bias into weight / bias.
    inv_std = gamma / jnp.sqrt(r_var + BN_EPS)                     # (N, F_out)
    wr = jnp.transpose(w_t, (0, 3, 2, 1))                          # (N, 3, Fi, Fo)
    wr = wr * inv_std[:, None, None, :]
    wrcat = wr.reshape(N_LAYERS, 3 * F, F)
    brf = (b_t * inv_std + beta - r_mean * inv_std).reshape(N_LAYERS, 1, F)

    wcat = jnp.concatenate([w0cat[None], wrcat], axis=0)           # (13, 3F, F)
    bias = jnp.concatenate([b0[None], brf], axis=0)                # (13, 1, F)
    wb = jnp.concatenate([wcat, bias], axis=1)                     # (13, 3F+1, F)

    fcw = fcw_t                                                    # (C, F) torch layout (VPU FC)
    fcb = fcb_t.reshape(num_classes, 1)                            # (C, 1)
    return (wb, fcw, fcb)


if __name__ == "__main__":
    key = jax.random.PRNGKey(0)
    num_channels, num_classes, seq_len = 4, 8, 16

    k_x, k_p = jax.random.split(key)
    x = jax.random.normal(k_x, (1, num_channels, seq_len), jnp.float32)
    params = init_params(k_p, num_channels, num_classes)

    out = rrcnn_forward(x, params)
    out = jax.block_until_ready(out)

    assert out.shape == (num_classes,)
    assert bool(jnp.isfinite(out).all())
    # softmax output sums to ~1 (approx-reciprocal normalization -> loose tol)
    assert abs(float(jnp.sum(out)) - 1.0) < 1e-2
    print("KERNEL_OK")
</pallas_src>

<mosaic_0001>
module attributes {stable_mosaic.version = 11 : i64} {
  func.func @rrcnn_kernel(%arg0: memref<16x64xf32, #tpu.memory_space<vmem>>, %arg1: memref<13x193x64xf32, #tpu.memory_space<vmem>>, %arg2: memref<8x64xf32, #tpu.memory_space<vmem>>, %arg3: memref<8x1xf32, #tpu.memory_space<vmem>>, %arg4: memref<8x1xf32, #tpu.memory_space<vmem>>) attributes {dimension_semantics = [], scalar_prefetch = 0 : i64, scratch_operands = 0 : i64, tpu.core_type = #tpu.core_type<tc>} {
    %c0 = arith.constant 0 : index
    %c0_0 = arith.constant 0 : index
    %0 = vector.load %arg0[%c0, %c0_0] : memref<16x64xf32, #tpu.memory_space<vmem>>, vector<16x64xf32>
    %1 = tpu.iota {dimensions = array<i32: 0>} : vector<16x1xi32>
    %c0_i32 = arith.constant 0 : i32
    %2 = vector.broadcast %c0_i32 : i32 to vector<16x1xi32>
    %3 = arith.cmpi sgt, %1, %2 : vector<16x1xi32>
    %4 = arith.extui %3 : vector<16x1xi1> to vector<16x1xi32>
    %5 = arith.sitofp %4 : vector<16x1xi32> to vector<16x1xf32>
    %c15_i32 = arith.constant 15 : i32
    %6 = vector.broadcast %c15_i32 : i32 to vector<16x1xi32>
    %7 = arith.cmpi slt, %1, %6 : vector<16x1xi32>
    %8 = arith.extui %7 : vector<16x1xi1> to vector<16x1xi32>
    %9 = arith.sitofp %8 : vector<16x1xi32> to vector<16x1xf32>
    %c1_i32 = arith.constant 1 : i32
    %10 = tpu.dynamic_rotate %0 by %c1_i32 dim 0 : vector<16x64xf32>, i32 -> vector<16x64xf32>
    %11 = vector.broadcast %5 : vector<16x1xf32> to vector<16x64xf32>
    %12 = arith.mulf %10, %11 : vector<16x64xf32>
    %c15_i32_1 = arith.constant 15 : i32
    %13 = tpu.dynamic_rotate %0 by %c15_i32_1 dim 0 : vector<16x64xf32>, i32 -> vector<16x64xf32>
    %14 = vector.broadcast %9 : vector<16x1xf32> to vector<16x64xf32>
    %15 = arith.mulf %13, %14 : vector<16x64xf32>
    %16 = tpu.concatenate %12, %0, %15 in 1 : vector<16x64xf32>, vector<16x64xf32>, vector<16x64xf32> -> vector<16x192xf32>
    %c0_2 = arith.constant 0 : index
    %c0_3 = arith.constant 0 : index
    %c0_4 = arith.constant 0 : index
    %17 = vector.load %arg1[%c0_2, %c0_3, %c0_4] : memref<13x193x64xf32, #tpu.memory_space<vmem>>, vector<1x193x64xf32>
    %18 = vector.shape_cast %17 : vector<1x193x64xf32> to vector<193x64xf32>
    %19 = vector.extract_strided_slice %18 {offsets = [0, 0], sizes = [192, 64], strides = [1, 1]} : vector<193x64xf32> to vector<192x64xf32>
    %20 = vector.extract_strided_slice %18 {offsets = [192, 0], sizes = [1, 64], strides = [1, 1]} : vector<193x64xf32> to vector<1x64xf32>
    %cst = arith.constant dense<0.000000e+00> : vector<16x64xf32>
    %21 = tpu.matmul %16, %19, %cst {dimension_numbers = #tpu.dot_dimension_numbers<[1], [0], [0], [1], [0, 0, 1, 1], [], []>} : vector<16x192xf32>, vector<192x64xf32>, vector<16x64xf32> -> vector<16x64xf32>
    %22 = vector.broadcast %20 : vector<1x64xf32> to vector<16x64xf32>
    %23 = arith.addf %21, %22 : vector<16x64xf32>
    %c1_i32_5 = arith.constant 1 : i32
    %24 = tpu.dynamic_rotate %23 by %c1_i32_5 dim 0 : vector<16x64xf32>, i32 -> vector<16x64xf32>
    %25 = vector.broadcast %5 : vector<16x1xf32> to vector<16x64xf32>
    %26 = arith.mulf %24, %25 : vector<16x64xf32>
    %c15_i32_6 = arith.constant 15 : i32
    %27 = tpu.dynamic_rotate %23 by %c15_i32_6 dim 0 : vector<16x64xf32>, i32 -> vector<16x64xf32>
    %28 = vector.broadcast %9 : vector<16x1xf32> to vector<16x64xf32>
    %29 = arith.mulf %27, %28 : vector<16x64xf32>
    %30 = tpu.concatenate %26, %23, %29 in 1 : vector<16x64xf32>, vector<16x64xf32>, vector<16x64xf32> -> vector<16x192xf32>
    %c1 = arith.constant 1 : index
    %c0_7 = arith.constant 0 : index
    %c0_8 = arith.constant 0 : index
    %31 = vector.load %arg1[%c1, %c0_7, %c0_8] : memref<13x193x64xf32, #tpu.memory_space<vmem>>, vector<1x193x64xf32>
    %32 = vector.shape_cast %31 : vector<1x193x64xf32> to vector<193x64xf32>
    %33 = vector.extract_strided_slice %32 {offsets = [0, 0], sizes = [192, 64], strides = [1, 1]} : vector<193x64xf32> to vector<192x64xf32>
    %34 = vector.extract_strided_slice %32 {offsets = [192, 0], sizes = [1, 64], strides = [1, 1]} : vector<193x64xf32> to vector<1x64xf32>
    %cst_9 = arith.constant dense<0.000000e+00> : vector<16x64xf32>
    %35 = tpu.matmul %30, %33, %cst_9 {dimension_numbers = #tpu.dot_dimension_numbers<[1], [0], [0], [1], [0, 0, 1, 1], [], []>} : vector<16x192xf32>, vector<192x64xf32>, vector<16x64xf32> -> vector<16x64xf32>
    %36 = vector.broadcast %34 : vector<1x64xf32> to vector<16x64xf32>
    %37 = arith.addf %35, %36 : vector<16x64xf32>
    %cst_10 = arith.constant 0.000000e+00 : f32
    %38 = vector.broadcast %cst_10 : f32 to vector<16x64xf32>
    %39 = arith.maximumf %37, %38 : vector<16x64xf32>
    %c1_i32_11 = arith.constant 1 : i32
    %40 = tpu.dynamic_rotate %39 by %c1_i32_11 dim 0 : vector<16x64xf32>, i32 -> vector<16x64xf32>
    %41 = vector.broadcast %5 : vector<16x1xf32> to vector<16x64xf32>
    %42 = arith.mulf %40, %41 : vector<16x64xf32>
    %c15_i32_12 = arith.constant 15 : i32
    %43 = tpu.dynamic_rotate %39 by %c15_i32_12 dim 0 : vector<16x64xf32>, i32 -> vector<16x64xf32>
    %44 = vector.broadcast %9 : vector<16x1xf32> to vector<16x64xf32>
    %45 = arith.mulf %43, %44 : vector<16x64xf32>
    %46 = tpu.concatenate %42, %39, %45 in 1 : vector<16x64xf32>, vector<16x64xf32>, vector<16x64xf32> -> vector<16x192xf32>
    %c2 = arith.constant 2 : index
    %c0_13 = arith.constant 0 : index
    %c0_14 = arith.constant 0 : index
    %47 = vector.load %arg1[%c2, %c0_13, %c0_14] : memref<13x193x64xf32, #tpu.memory_space<vmem>>, vector<1x193x64xf32>
    %48 = vector.shape_cast %47 : vector<1x193x64xf32> to vector<193x64xf32>
    %49 = vector.extract_strided_slice %48 {offsets = [0, 0], sizes = [192, 64], strides = [1, 1]} : vector<193x64xf32> to vector<192x64xf32>
    %50 = vector.extract_strided_slice %48 {offsets = [192, 0], sizes = [1, 64], strides = [1, 1]} : vector<193x64xf32> to vector<1x64xf32>
    %cst_15 = arith.constant dense<0.000000e+00> : vector<16x64xf32>
    %51 = tpu.matmul %46, %49, %cst_15 {dimension_numbers = #tpu.dot_dimension_numbers<[1], [0], [0], [1], [0, 0, 1, 1], [], []>} : vector<16x192xf32>, vector<192x64xf32>, vector<16x64xf32> -> vector<16x64xf32>
    %52 = vector.broadcast %50 : vector<1x64xf32> to vector<16x64xf32>
    %53 = arith.addf %51, %52 : vector<16x64xf32>
    %cst_16 = arith.constant 0.000000e+00 : f32
    %54 = vector.broadcast %cst_16 : f32 to vector<16x64xf32>
    %55 = arith.maximumf %53, %54 : vector<16x64xf32>
    %56 = arith.addf %55, %23 : vector<16x64xf32>
    %cst_17 = arith.constant 0.000000e+00 : f32
    %57 = vector.broadcast %cst_17 : f32 to vector<16x64xf32>
    %58 = arith.cmpf oge, %56, %57 : vector<16x64xf32>
    %cst_18 = arith.constant 0.229166672 : f32
    %59 = vector.broadcast %cst_18 : f32 to vector<16x64xf32>
    %60 = arith.mulf %59, %56 : vector<16x64xf32>
    %61 = arith.select %58, %56, %60 : vector<16x64xi1>, vector<16x64xf32>
    %c1_i32_19 = arith.constant 1 : i32
    %62 = tpu.dynamic_rotate %61 by %c1_i32_19 dim 0 : vector<16x64xf32>, i32 -> vector<16x64xf32>
    %63 = vector.broadcast %5 : vector<16x1xf32> to vector<16x64xf32>
    %64 = arith.mulf %62, %63 : vector<16x64xf32>
    %c15_i32_20 = arith.constant 15 : i32
    %65 = tpu.dynamic_rotate %61 by %c15_i32_20 dim 0 : vector<16x64xf32>, i32 -> vector<16x64xf32>
    %66 = vector.broadcast %9 : vector<16x1xf32> to vector<16x64xf32>
    %67 = arith.mulf %65, %66 : vector<16x64xf32>
    %68 = tpu.concatenate %64, %61, %67 in 1 : vector<16x64xf32>, vector<16x64xf32>, vector<16x64xf32> -> vector<16x192xf32>
    %c3 = arith.constant 3 : index
    %c0_21 = arith.constant 0 : index
    %c0_22 = arith.constant 0 : index
    %69 = vector.load %arg1[%c3, %c0_21, %c0_22] : memref<13x193x64xf32, #tpu.memory_space<vmem>>, vector<1x193x64xf32>
    %70 = vector.shape_cast %69 : vector<1x193x64xf32> to vector<193x64xf32>
    %71 = vector.extract_strided_slice %70 {offsets = [0, 0], sizes = [192, 64], strides = [1, 1]} : vector<193x64xf32> to vector<192x64xf32>
    %72 = vector.extract_strided_slice %70 {offsets = [192, 0], sizes = [1, 64], strides = [1, 1]} : vector<193x64xf32> to vector<1x64xf32>
    %cst_23 = arith.constant dense<0.000000e+00> : vector<16x64xf32>
    %73 = tpu.matmul %68, %71, %cst_23 {dimension_numbers = #tpu.dot_dimension_numbers<[1], [0], [0], [1], [0, 0, 1, 1], [], []>} : vector<16x192xf32>, vector<192x64xf32>, vector<16x64xf32> -> vector<16x64xf32>
    %74 = vector.broadcast %72 : vector<1x64xf32> to vector<16x64xf32>
    %75 = arith.addf %73, %74 : vector<16x64xf32>
    %cst_24 = arith.constant 0.000000e+00 : f32
    %76 = vector.broadcast %cst_24 : f32 to vector<16x64xf32>
    %77 = arith.maximumf %75, %76 : vector<16x64xf32>
    %c1_i32_25 = arith.constant 1 : i32
    %78 = tpu.dynamic_rotate %77 by %c1_i32_25 dim 0 : vector<16x64xf32>, i32 -> vector<16x64xf32>
    %79 = vector.broadcast %5 : vector<16x1xf32> to vector<16x64xf32>
    %80 = arith.mulf %78, %79 : vector<16x64xf32>
    %c15_i32_26 = arith.constant 15 : i32
    %81 = tpu.dynamic_rotate %77 by %c15_i32_26 dim 0 : vector<16x64xf32>, i32 -> vector<16x64xf32>
    %82 = vector.broadcast %9 : vector<16x1xf32> to vector<16x64xf32>
    %83 = arith.mulf %81, %82 : vector<16x64xf32>
    %84 = tpu.concatenate %80, %77, %83 in 1 : vector<16x64xf32>, vector<16x64xf32>, vector<16x64xf32> -> vector<16x192xf32>
    %c4 = arith.constant 4 : index
    %c0_27 = arith.constant 0 : index
    %c0_28 = arith.constant 0 : index
    %85 = vector.load %arg1[%c4, %c0_27, %c0_28] : memref<13x193x64xf32, #tpu.memory_space<vmem>>, vector<1x193x64xf32>
    %86 = vector.shape_cast %85 : vector<1x193x64xf32> to vector<193x64xf32>
    %87 = vector.extract_strided_slice %86 {offsets = [0, 0], sizes = [192, 64], strides = [1, 1]} : vector<193x64xf32> to vector<192x64xf32>
    %88 = vector.extract_strided_slice %86 {offsets = [192, 0], sizes = [1, 64], strides = [1, 1]} : vector<193x64xf32> to vector<1x64xf32>
    %cst_29 = arith.constant dense<0.000000e+00> : vector<16x64xf32>
    %89 = tpu.matmul %84, %87, %cst_29 {dimension_numbers = #tpu.dot_dimension_numbers<[1], [0], [0], [1], [0, 0, 1, 1], [], []>} : vector<16x192xf32>, vector<192x64xf32>, vector<16x64xf32> -> vector<16x64xf32>
    %90 = vector.broadcast %88 : vector<1x64xf32> to vector<16x64xf32>
    %91 = arith.addf %89, %90 : vector<16x64xf32>
    %cst_30 = arith.constant 0.000000e+00 : f32
    %92 = vector.broadcast %cst_30 : f32 to vector<16x64xf32>
    %93 = arith.maximumf %91, %92 : vector<16x64xf32>
    %94 = arith.addf %93, %61 : vector<16x64xf32>
    %cst_31 = arith.constant 0.000000e+00 : f32
    %95 = vector.broadcast %cst_31 : f32 to vector<16x64xf32>
    %96 = arith.cmpf oge, %94, %95 : vector<16x64xf32>
    %cst_32 = arith.constant 0.229166672 : f32
    %97 = vector.broadcast %cst_32 : f32 to vector<16x64xf32>
    %98 = arith.mulf %97, %94 : vector<16x64xf32>
    %99 = arith.select %96, %94, %98 : vector<16x64xi1>, vector<16x64xf32>
    %100 = arith.addf %99, %23 : vector<16x64xf32>
    %c1_i32_33 = arith.constant 1 : i32
    %101 = tpu.dynamic_rotate %100 by %c1_i32_33 dim 0 : vector<16x64xf32>, i32 -> vector<16x64xf32>
    %102 = vector.broadcast %5 : vector<16x1xf32> to vector<16x64xf32>
    %103 = arith.mulf %101, %102 : vector<16x64xf32>
    %c15_i32_34 = arith.constant 15 : i32
    %104 = tpu.dynamic_rotate %100 by %c15_i32_34 dim 0 : vector<16x64xf32>, i32 -> vector<16x64xf32>
    %105 = vector.broadcast %9 : vector<16x1xf32> to vector<16x64xf32>
    %106 = arith.mulf %104, %105 : vector<16x64xf32>
    %107 = tpu.concatenate %103, %100, %106 in 1 : vector<16x64xf32>, vector<16x64xf32>, vector<16x64xf32> -> vector<16x192xf32>
    %c5 = arith.constant 5 : index
    %c0_35 = arith.constant 0 : index
    %c0_36 = arith.constant 0 : index
    %108 = vector.load %arg1[%c5, %c0_35, %c0_36] : memref<13x193x64xf32, #tpu.memory_space<vmem>>, vector<1x193x64xf32>
    %109 = vector.shape_cast %108 : vector<1x193x64xf32> to vector<193x64xf32>
    %110 = vector.extract_strided_slice %109 {offsets = [0, 0], sizes = [192, 64], strides = [1, 1]} : vector<193x64xf32> to vector<192x64xf32>
    %111 = vector.extract_strided_slice %109 {offsets = [192, 0], sizes = [1, 64], strides = [1, 1]} : vector<193x64xf32> to vector<1x64xf32>
    %cst_37 = arith.constant dense<0.000000e+00> : vector<16x64xf32>
    %112 = tpu.matmul %107, %110, %cst_37 {dimension_numbers = #tpu.dot_dimension_numbers<[1], [0], [0], [1], [0, 0, 1, 1], [], []>} : vector<16x192xf32>, vector<192x64xf32>, vector<16x64xf32> -> vector<16x64xf32>
    %113 = vector.broadcast %111 : vector<1x64xf32> to vector<16x64xf32>
    %114 = arith.addf %112, %113 : vector<16x64xf32>
    %cst_38 = arith.constant 0.000000e+00 : f32
    %115 = vector.broadcast %cst_38 : f32 to vector<16x64xf32>
    %116 = arith.maximumf %114, %115 : vector<16x64xf32>
    %c1_i32_39 = arith.constant 1 : i32
    %117 = tpu.dynamic_rotate %116 by %c1_i32_39 dim 0 : vector<16x64xf32>, i32 -> vector<16x64xf32>
    %118 = vector.broadcast %5 : vector<16x1xf32> to vector<16x64xf32>
    %119 = arith.mulf %117, %118 : vector<16x64xf32>
    %c15_i32_40 = arith.constant 15 : i32
    %120 = tpu.dynamic_rotate %116 by %c15_i32_40 dim 0 : vector<16x64xf32>, i32 -> vector<16x64xf32>
    %121 = vector.broadcast %9 : vector<16x1xf32> to vector<16x64xf32>
    %122 = arith.mulf %120, %121 : vector<16x64xf32>
    %123 = tpu.concatenate %119, %116, %122 in 1 : vector<16x64xf32>, vector<16x64xf32>, vector<16x64xf32> -> vector<16x192xf32>
    %c6 = arith.constant 6 : index
    %c0_41 = arith.constant 0 : index
    %c0_42 = arith.constant 0 : index
    %124 = vector.load %arg1[%c6, %c0_41, %c0_42] : memref<13x193x64xf32, #tpu.memory_space<vmem>>, vector<1x193x64xf32>
    %125 = vector.shape_cast %124 : vector<1x193x64xf32> to vector<193x64xf32>
    %126 = vector.extract_strided_slice %125 {offsets = [0, 0], sizes = [192, 64], strides = [1, 1]} : vector<193x64xf32> to vector<192x64xf32>
    %127 = vector.extract_strided_slice %125 {offsets = [192, 0], sizes = [1, 64], strides = [1, 1]} : vector<193x64xf32> to vector<1x64xf32>
    %cst_43 = arith.constant dense<0.000000e+00> : vector<16x64xf32>
    %128 = tpu.matmul %123, %126, %cst_43 {dimension_numbers = #tpu.dot_dimension_numbers<[1], [0], [0], [1], [0, 0, 1, 1], [], []>} : vector<16x192xf32>, vector<192x64xf32>, vector<16x64xf32> -> vector<16x64xf32>
    %129 = vector.broadcast %127 : vector<1x64xf32> to vector<16x64xf32>
    %130 = arith.addf %128, %129 : vector<16x64xf32>
    %cst_44 = arith.constant 0.000000e+00 : f32
    %131 = vector.broadcast %cst_44 : f32 to vector<16x64xf32>
    %132 = arith.maximumf %130, %131 : vector<16x64xf32>
    %133 = arith.addf %132, %100 : vector<16x64xf32>
    %cst_45 = arith.constant 0.000000e+00 : f32
    %134 = vector.broadcast %cst_45 : f32 to vector<16x64xf32>
    %135 = arith.cmpf oge, %133, %134 : vector<16x64xf32>
    %cst_46 = arith.constant 0.229166672 : f32
    %136 = vector.broadcast %cst_46 : f32 to vector<16x64xf32>
    %137 = arith.mulf %136, %133 : vector<16x64xf32>
    %138 = arith.select %135, %133, %137 : vector<16x64xi1>, vector<16x64xf32>
    %c1_i32_47 = arith.constant 1 : i32
    %139 = tpu.dynamic_rotate %138 by %c1_i32_47 dim 0 : vector<16x64xf32>, i32 -> vector<16x64xf32>
    %140 = vector.broadcast %5 : vector<16x1xf32> to vector<16x64xf32>
    %141 = arith.mulf %139, %140 : vector<16x64xf32>
    %c15_i32_48 = arith.constant 15 : i32
    %142 = tpu.dynamic_rotate %138 by %c15_i32_48 dim 0 : vector<16x64xf32>, i32 -> vector<16x64xf32>
    %143 = vector.broadcast %9 : vector<16x1xf32> to vector<16x64xf32>
    %144 = arith.mulf %142, %143 : vector<16x64xf32>
    %145 = tpu.concatenate %141, %138, %144 in 1 : vector<16x64xf32>, vector<16x64xf32>, vector<16x64xf32> -> vector<16x192xf32>
    %c7 = arith.constant 7 : index
    %c0_49 = arith.constant 0 : index
    %c0_50 = arith.constant 0 : index
    %146 = vector.load %arg1[%c7, %c0_49, %c0_50] : memref<13x193x64xf32, #tpu.memory_space<vmem>>, vector<1x193x64xf32>
    %147 = vector.shape_cast %146 : vector<1x193x64xf32> to vector<193x64xf32>
    %148 = vector.extract_strided_slice %147 {offsets = [0, 0], sizes = [192, 64], strides = [1, 1]} : vector<193x64xf32> to vector<192x64xf32>
    %149 = vector.extract_strided_slice %147 {offsets = [192, 0], sizes = [1, 64], strides = [1, 1]} : vector<193x64xf32> to vector<1x64xf32>
    %cst_51 = arith.constant dense<0.000000e+00> : vector<16x64xf32>
    %150 = tpu.matmul %145, %148, %cst_51 {dimension_numbers = #tpu.dot_dimension_numbers<[1], [0], [0], [1], [0, 0, 1, 1], [], []>} : vector<16x192xf32>, vector<192x64xf32>, vector<16x64xf32> -> vector<16x64xf32>
    %151 = vector.broadcast %149 : vector<1x64xf32> to vector<16x64xf32>
    %152 = arith.addf %150, %151 : vector<16x64xf32>
    %cst_52 = arith.constant 0.000000e+00 : f32
    %153 = vector.broadcast %cst_52 : f32 to vector<16x64xf32>
    %154 = arith.maximumf %152, %153 : vector<16x64xf32>
    %c1_i32_53 = arith.constant 1 : i32
    %155 = tpu.dynamic_rotate %154 by %c1_i32_53 dim 0 : vector<16x64xf32>, i32 -> vector<16x64xf32>
    %156 = vector.broadcast %5 : vector<16x1xf32> to vector<16x64xf32>
    %157 = arith.mulf %155, %156 : vector<16x64xf32>
    %c15_i32_54 = arith.constant 15 : i32
    %158 = tpu.dynamic_rotate %154 by %c15_i32_54 dim 0 : vector<16x64xf32>, i32 -> vector<16x64xf32>
    %159 = vector.broadcast %9 : vector<16x1xf32> to vector<16x64xf32>
    %160 = arith.mulf %158, %159 : vector<16x64xf32>
    %161 = tpu.concatenate %157, %154, %160 in 1 : vector<16x64xf32>, vector<16x64xf32>, vector<16x64xf32> -> vector<16x192xf32>
    %c8 = arith.constant 8 : index
    %c0_55 = arith.constant 0 : index
    %c0_56 = arith.constant 0 : index
    %162 = vector.load %arg1[%c8, %c0_55, %c0_56] : memref<13x193x64xf32, #tpu.memory_space<vmem>>, vector<1x193x64xf32>
    %163 = vector.shape_cast %162 : vector<1x193x64xf32> to vector<193x64xf32>
    %164 = vector.extract_strided_slice %163 {offsets = [0, 0], sizes = [192, 64], strides = [1, 1]} : vector<193x64xf32> to vector<192x64xf32>
    %165 = vector.extract_strided_slice %163 {offsets = [192, 0], sizes = [1, 64], strides = [1, 1]} : vector<193x64xf32> to vector<1x64xf32>
    %cst_57 = arith.constant dense<0.000000e+00> : vector<16x64xf32>
    %166 = tpu.matmul %161, %164, %cst_57 {dimension_numbers = #tpu.dot_dimension_numbers<[1], [0], [0], [1], [0, 0, 1, 1], [], []>} : vector<16x192xf32>, vector<192x64xf32>, vector<16x64xf32> -> vector<16x64xf32>
    %167 = vector.broadcast %165 : vector<1x64xf32> to vector<16x64xf32>
    %168 = arith.addf %166, %167 : vector<16x64xf32>
    %cst_58 = arith.constant 0.000000e+00 : f32
    %169 = vector.broadcast %cst_58 : f32 to vector<16x64xf32>
    %170 = arith.maximumf %168, %169 : vector<16x64xf32>
    %171 = arith.addf %170, %138 : vector<16x64xf32>
    %cst_59 = arith.constant 0.000000e+00 : f32
    %172 = vector.broadcast %cst_59 : f32 to vector<16x64xf32>
    %173 = arith.cmpf oge, %171, %172 : vector<16x64xf32>
    %cst_60 = arith.constant 0.229166672 : f32
    %174 = vector.broadcast %cst_60 : f32 to vector<16x64xf32>
    %175 = arith.mulf %174, %171 : vector<16x64xf32>
    %176 = arith.select %173, %171, %175 : vector<16x64xi1>, vector<16x64xf32>
    %177 = arith.addf %176, %100 : vector<16x64xf32>
    %c1_i32_61 = arith.constant 1 : i32
    %178 = tpu.dynamic_rotate %177 by %c1_i32_61 dim 0 : vector<16x64xf32>, i32 -> vector<16x64xf32>
    %179 = vector.broadcast %5 : vector<16x1xf32> to vector<16x64xf32>
    %180 = arith.mulf %178, %179 : vector<16x64xf32>
    %c15_i32_62 = arith.constant 15 : i32
    %181 = tpu.dynamic_rotate %177 by %c15_i32_62 dim 0 : vector<16x64xf32>, i32 -> vector<16x64xf32>
    %182 = vector.broadcast %9 : vector<16x1xf32> to vector<16x64xf32>
    %183 = arith.mulf %181, %182 : vector<16x64xf32>
    %184 = tpu.concatenate %180, %177, %183 in 1 : vector<16x64xf32>, vector<16x64xf32>, vector<16x64xf32> -> vector<16x192xf32>
    %c9 = arith.constant 9 : index
    %c0_63 = arith.constant 0 : index
    %c0_64 = arith.constant 0 : index
    %185 = vector.load %arg1[%c9, %c0_63, %c0_64] : memref<13x193x64xf32, #tpu.memory_space<vmem>>, vector<1x193x64xf32>
    %186 = vector.shape_cast %185 : vector<1x193x64xf32> to vector<193x64xf32>
    %187 = vector.extract_strided_slice %186 {offsets = [0, 0], sizes = [192, 64], strides = [1, 1]} : vector<193x64xf32> to vector<192x64xf32>
    %188 = vector.extract_strided_slice %186 {offsets = [192, 0], sizes = [1, 64], strides = [1, 1]} : vector<193x64xf32> to vector<1x64xf32>
    %cst_65 = arith.constant dense<0.000000e+00> : vector<16x64xf32>
    %189 = tpu.matmul %184, %187, %cst_65 {dimension_numbers = #tpu.dot_dimension_numbers<[1], [0], [0], [1], [0, 0, 1, 1], [], []>} : vector<16x192xf32>, vector<192x64xf32>, vector<16x64xf32> -> vector<16x64xf32>
    %190 = vector.broadcast %188 : vector<1x64xf32> to vector<16x64xf32>
    %191 = arith.addf %189, %190 : vector<16x64xf32>
    %cst_66 = arith.constant 0.000000e+00 : f32
    %192 = vector.broadcast %cst_66 : f32 to vector<16x64xf32>
    %193 = arith.maximumf %191, %192 : vector<16x64xf32>
    %c1_i32_67 = arith.constant 1 : i32
    %194 = tpu.dynamic_rotate %193 by %c1_i32_67 dim 0 : vector<16x64xf32>, i32 -> vector<16x64xf32>
    %195 = vector.broadcast %5 : vector<16x1xf32> to vector<16x64xf32>
    %196 = arith.mulf %194, %195 : vector<16x64xf32>
    %c15_i32_68 = arith.constant 15 : i32
    %197 = tpu.dynamic_rotate %193 by %c15_i32_68 dim 0 : vector<16x64xf32>, i32 -> vector<16x64xf32>
    %198 = vector.broadcast %9 : vector<16x1xf32> to vector<16x64xf32>
    %199 = arith.mulf %197, %198 : vector<16x64xf32>
    %200 = tpu.concatenate %196, %193, %199 in 1 : vector<16x64xf32>, vector<16x64xf32>, vector<16x64xf32> -> vector<16x192xf32>
    %c10 = arith.constant 10 : index
    %c0_69 = arith.constant 0 : index
    %c0_70 = arith.constant 0 : index
    %201 = vector.load %arg1[%c10, %c0_69, %c0_70] : memref<13x193x64xf32, #tpu.memory_space<vmem>>, vector<1x193x64xf32>
    %202 = vector.shape_cast %201 : vector<1x193x64xf32> to vector<193x64xf32>
    %203 = vector.extract_strided_slice %202 {offsets = [0, 0], sizes = [192, 64], strides = [1, 1]} : vector<193x64xf32> to vector<192x64xf32>
    %204 = vector.extract_strided_slice %202 {offsets = [192, 0], sizes = [1, 64], strides = [1, 1]} : vector<193x64xf32> to vector<1x64xf32>
    %cst_71 = arith.constant dense<0.000000e+00> : vector<16x64xf32>
    %205 = tpu.matmul %200, %203, %cst_71 {dimension_numbers = #tpu.dot_dimension_numbers<[1], [0], [0], [1], [0, 0, 1, 1], [], []>} : vector<16x192xf32>, vector<192x64xf32>, vector<16x64xf32> -> vector<16x64xf32>
    %206 = vector.broadcast %204 : vector<1x64xf32> to vector<16x64xf32>
    %207 = arith.addf %205, %206 : vector<16x64xf32>
    %cst_72 = arith.constant 0.000000e+00 : f32
    %208 = vector.broadcast %cst_72 : f32 to vector<16x64xf32>
    %209 = arith.maximumf %207, %208 : vector<16x64xf32>
    %210 = arith.addf %209, %177 : vector<16x64xf32>
    %cst_73 = arith.constant 0.000000e+00 : f32
    %211 = vector.broadcast %cst_73 : f32 to vector<16x64xf32>
    %212 = arith.cmpf oge, %210, %211 : vector<16x64xf32>
    %cst_74 = arith.constant 0.229166672 : f32
    %213 = vector.broadcast %cst_74 : f32 to vector<16x64xf32>
    %214 = arith.mulf %213, %210 : vector<16x64xf32>
    %215 = arith.select %212, %210, %214 : vector<16x64xi1>, vector<16x64xf32>
    %c1_i32_75 = arith.constant 1 : i32
    %216 = tpu.dynamic_rotate %215 by %c1_i32_75 dim 0 : vector<16x64xf32>, i32 -> vector<16x64xf32>
    %217 = vector.broadcast %5 : vector<16x1xf32> to vector<16x64xf32>
    %218 = arith.mulf %216, %217 : vector<16x64xf32>
    %c15_i32_76 = arith.constant 15 : i32
    %219 = tpu.dynamic_rotate %215 by %c15_i32_76 dim 0 : vector<16x64xf32>, i32 -> vector<16x64xf32>
    %220 = vector.broadcast %9 : vector<16x1xf32> to vector<16x64xf32>
    %221 = arith.mulf %219, %220 : vector<16x64xf32>
    %222 = tpu.concatenate %218, %215, %221 in 1 : vector<16x64xf32>, vector<16x64xf32>, vector<16x64xf32> -> vector<16x192xf32>
    %c11 = arith.constant 11 : index
    %c0_77 = arith.constant 0 : index
    %c0_78 = arith.constant 0 : index
    %223 = vector.load %arg1[%c11, %c0_77, %c0_78] : memref<13x193x64xf32, #tpu.memory_space<vmem>>, vector<1x193x64xf32>
    %224 = vector.shape_cast %223 : vector<1x193x64xf32> to vector<193x64xf32>
    %225 = vector.extract_strided_slice %224 {offsets = [0, 0], sizes = [192, 64], strides = [1, 1]} : vector<193x64xf32> to vector<192x64xf32>
    %226 = vector.extract_strided_slice %224 {offsets = [192, 0], sizes = [1, 64], strides = [1, 1]} : vector<193x64xf32> to vector<1x64xf32>
    %cst_79 = arith.constant dense<0.000000e+00> : vector<16x64xf32>
    %227 = tpu.matmul %222, %225, %cst_79 {dimension_numbers = #tpu.dot_dimension_numbers<[1], [0], [0], [1], [0, 0, 1, 1], [], []>} : vector<16x192xf32>, vector<192x64xf32>, vector<16x64xf32> -> vector<16x64xf32>
    %228 = vector.broadcast %226 : vector<1x64xf32> to vector<16x64xf32>
    %229 = arith.addf %227, %228 : vector<16x64xf32>
    %cst_80 = arith.constant 0.000000e+00 : f32
    %230 = vector.broadcast %cst_80 : f32 to vector<16x64xf32>
    %231 = arith.maximumf %229, %230 : vector<16x64xf32>
    %c1_i32_81 = arith.constant 1 : i32
    %232 = tpu.dynamic_rotate %231 by %c1_i32_81 dim 0 : vector<16x64xf32>, i32 -> vector<16x64xf32>
    %233 = vector.broadcast %5 : vector<16x1xf32> to vector<16x64xf32>
    %234 = arith.mulf %232, %233 : vector<16x64xf32>
    %c15_i32_82 = arith.constant 15 : i32
    %235 = tpu.dynamic_rotate %231 by %c15_i32_82 dim 0 : vector<16x64xf32>, i32 -> vector<16x64xf32>
    %236 = vector.broadcast %9 : vector<16x1xf32> to vector<16x64xf32>
    %237 = arith.mulf %235, %236 : vector<16x64xf32>
    %238 = tpu.concatenate %234, %231, %237 in 1 : vector<16x64xf32>, vector<16x64xf32>, vector<16x64xf32> -> vector<16x192xf32>
    %c12 = arith.constant 12 : index
    %c0_83 = arith.constant 0 : index
    %c0_84 = arith.constant 0 : index
    %239 = vector.load %arg1[%c12, %c0_83, %c0_84] : memref<13x193x64xf32, #tpu.memory_space<vmem>>, vector<1x193x64xf32>
    %240 = vector.shape_cast %239 : vector<1x193x64xf32> to vector<193x64xf32>
    %241 = vector.extract_strided_slice %240 {offsets = [0, 0], sizes = [192, 64], strides = [1, 1]} : vector<193x64xf32> to vector<192x64xf32>
    %242 = vector.extract_strided_slice %240 {offsets = [192, 0], sizes = [1, 64], strides = [1, 1]} : vector<193x64xf32> to vector<1x64xf32>
    %cst_85 = arith.constant dense<0.000000e+00> : vector<16x64xf32>
    %243 = tpu.matmul %238, %241, %cst_85 {dimension_numbers = #tpu.dot_dimension_numbers<[1], [0], [0], [1], [0, 0, 1, 1], [], []>} : vector<16x192xf32>, vector<192x64xf32>, vector<16x64xf32> -> vector<16x64xf32>
    %244 = vector.broadcast %242 : vector<1x64xf32> to vector<16x64xf32>
    %245 = arith.addf %243, %244 : vector<16x64xf32>
    %cst_86 = arith.constant 0.000000e+00 : f32
    %246 = vector.broadcast %cst_86 : f32 to vector<16x64xf32>
    %247 = arith.maximumf %245, %246 : vector<16x64xf32>
    %248 = arith.addf %247, %215 : vector<16x64xf32>
    %cst_87 = arith.constant 0.000000e+00 : f32
    %249 = vector.broadcast %cst_87 : f32 to vector<16x64xf32>
    %250 = arith.cmpf oge, %248, %249 : vector<16x64xf32>
    %cst_88 = arith.constant 0.229166672 : f32
    %251 = vector.broadcast %cst_88 : f32 to vector<16x64xf32>
    %252 = arith.mulf %251, %248 : vector<16x64xf32>
    %253 = arith.select %250, %248, %252 : vector<16x64xi1>, vector<16x64xf32>
    %254 = arith.addf %253, %177 : vector<16x64xf32>
    %cst_89 = arith.constant dense<0.000000e+00> : vector<64xf32>
    %255 = vector.multi_reduction <add>, %254, %cst_89 [0] : vector<16x64xf32> to vector<64xf32>
    %256 = vector.shape_cast %255 : vector<64xf32> to vector<1x64xf32>
    %cst_90 = arith.constant 1.600000e+01 : f32
    %257 = vector.broadcast %cst_90 : f32 to vector<1x64xf32>
    %258 = arith.divf %256, %257 : vector<1x64xf32>
    %c0_91 = arith.constant 0 : index
    %c0_92 = arith.constant 0 : index
    %259 = vector.load %arg2[%c0_91, %c0_92] : memref<8x64xf32, #tpu.memory_space<vmem>>, vector<8x64xf32>
    %260 = vector.broadcast %258 : vector<1x64xf32> to vector<8x64xf32>
    %261 = arith.mulf %259, %260 : vector<8x64xf32>
    %cst_93 = arith.constant dense<0.000000e+00> : vector<8xf32>
    %262 = vector.multi_reduction <add>, %261, %cst_93 [1] : vector<8x64xf32> to vector<8xf32>
    %263 = vector.shape_cast %262 : vector<8xf32> to vector<8x1xf32>
    %c0_94 = arith.constant 0 : index
    %c0_95 = arith.constant 0 : index
    %264 = vector.load %arg3[%c0_94, %c0_95] : memref<8x1xf32, #tpu.memory_space<vmem>>, vector<8x1xf32>
    %265 = arith.addf %263, %264 : vector<8x1xf32>
    %cst_96 = arith.constant dense<0xFF800000> : vector<1xf32>
    %266 = vector.multi_reduction <maximumf>, %265, %cst_96 [0] : vector<8x1xf32> to vector<1xf32>
    %267 = vector.shape_cast %266 : vector<1xf32> to vector<1x1xf32>
    %268 = vector.broadcast %267 : vector<1x1xf32> to vector<8x1xf32>
    %269 = arith.subf %265, %268 : vector<8x1xf32>
    %270 = math.exp %269 : vector<8x1xf32>
    %cst_97 = arith.constant dense<0.000000e+00> : vector<1xf32>
    %271 = vector.multi_reduction <add>, %270, %cst_97 [0] : vector<8x1xf32> to vector<1xf32>
    %272 = vector.shape_cast %271 : vector<1xf32> to vector<1x1xf32>
    %273 = tpu.reciprocal %272 {approx = true} : vector<1x1xf32> -> vector<1x1xf32>
    %274 = vector.broadcast %273 : vector<1x1xf32> to vector<8x1xf32>
    %275 = arith.mulf %270, %274 : vector<8x1xf32>
    %c0_98 = arith.constant 0 : index
    %c0_99 = arith.constant 0 : index
    %276 = vector.load %arg4[%c0_98, %c0_99] : memref<8x1xf32, #tpu.memory_space<vmem>>, vector<8x1xf32>
    tpu.vector_store %arg4[%c0_98, %c0_99], %275 {strides = array<i32>} : memref<8x1xf32, #tpu.memory_space<vmem>>, vector<8x1xf32>,
    return
  }
}

</mosaic_0001>

<llo_original>
// kernel: tpu_custom_call.1
$region0: #{tpu_custom_call.1}
  #allocation0 [shape = 'u32[]', space=smem, size = 0x4, offset = 0x4, fixed_abs, tag = 'smem constant byte address 0x4 - core index']
  #allocation1 [shape = 'u32[144,128]{1,0:T(1,128)}', space=vmem, size = 0x12000, scoped, tag = 'internal scratch']
  %s0 = inlined_call_operand.vmem [shape: f32[16,64], index: 0, kind: input, shape index: {}]
  %s1 = inlined_call_operand.vmem [shape: f32[13,193,64], index: 1, kind: input, shape index: {}]
  %s2 = inlined_call_operand.vmem [shape: f32[8,64], index: 2, kind: input, shape index: {}]
  %s3 = inlined_call_operand.vmem [shape: f32[8,1], index: 3, kind: input, shape index: {}]
  %s4 = inlined_call_operand.vmem [shape: f32[8,1], index: 4, kind: output, shape index: {}]
  %s5 = sld [smem:[#allocation0]]
  $region26: #{tpu_custom_call.1} parent=0
    _
  %s7 = ssub.s32 1, %s5
  %s8 = scalar_select 0, %s7, %s5
  // Predicated region
  $region2: #{tpu_custom_call.1} parent=0 // pred_check
    _
  $region3: #{tpu_custom_call.1} parent=0 // pred_check_branch
    %10 = sbr.rel (0) target = $region5
  $region4: #{tpu_custom_call.1} parent=0 // pred_region
    _
  $region5: #{tpu_custom_call.1} parent=0 // pred_fallthru
    _
  // Predicated region
  $region6: #{tpu_custom_call.1} parent=0 // pred_check
    _
  $region7: #{tpu_custom_call.1} parent=0 // pred_check_branch
    %12 = sbr.rel (0) target = $region9
  $region8: #{tpu_custom_call.1} parent=0 // pred_region
    _
  $region9: #{tpu_custom_call.1} parent=0 // pred_fallthru
    _
  // Predicated region
  $region10: #{tpu_custom_call.1} parent=0 // pred_check
    _
  $region11: #{tpu_custom_call.1} parent=0 // pred_check_branch
    %14 = sbr.rel (0) target = $region13
  $region12: #{tpu_custom_call.1} parent=0 // pred_region
    _
  $region13: #{tpu_custom_call.1} parent=0 // pred_fallthru
    _
  // Predicated region
  $region14: #{tpu_custom_call.1} parent=0 // pred_check
    _
  $region15: #{tpu_custom_call.1} parent=0 // pred_check_branch
    %16 = sbr.rel (0) target = $region17
  $region16: #{tpu_custom_call.1} parent=0 // pred_region
    _
  $region17: #{tpu_custom_call.1} parent=0 // pred_fallthru
    _
  %v17 = vld [vmem:[%s0] sm:$0xff]
  %v18 = vld [vmem:[%s0 + $0x8] sm:$0xff]
  %v19 = vlaneseq
  %v20 = vshrl.u32 %v19, 7
  %v21 = vadd.s32 %v20, 8
  %vm22 = vcmp.gt.s32.totalorder %v20, 0
  %vm23 = vcmp.gt.s32.totalorder %v21, 0
  %v24 = vsel %vm22, 1, 0
  %v25 = vsel %vm23, 1, 0
  %v26 = vcvt.s32.f32 %v24
  %v27 = vcvt.s32.f32 %v25
  %vm28 = vcmp.lt.s32.totalorder %v20, 15
  %vm29 = vcmp.lt.s32.totalorder %v21, 15
  %v30 = vsel %vm28, 1, 0
  %v31 = vsel %vm29, 1, 0
  %v32 = vcvt.s32.f32 %v30
  %v33 = vcvt.s32.f32 %v31
  %v34 = vrot.slane %v17, 7
  %v35 = vrot.slane %v18, 7
  %vm36 = vcmp.lt.s32.totalorder %v20, 1
  %v37 = vsel %vm36, %v34, %v35
  %v38 = vsel %vm36, %v35, %v34
  %v39 = vmul.f32 %v38, %v26
  %v40 = vmul.f32 %v37, %v27
  %v41 = vrot.slane %v17, 1
  %v42 = vrot.slane %v18, 1
  %vm43 = vcmp.lt.s32.totalorder %v20, 7
  %v44 = vsel %vm43, %v41, %v42
  %v45 = vsel %vm43, %v42, %v41
  %v46 = vmul.f32 %v44, %v32
  %v47 = vmul.f32 %v45, %v33
  %50 = vrot.lane.b32.xlu0 %v17, 64
  %v51 = vpop.permute.xlu0 %50
  %52 = vrot.lane.b32.xlu0 %v18, 64
  %v53 = vpop.permute.xlu0 %52
  %vm56 = vcmask 523264
  %v57 = vsel %vm56, %v39, %v51
  %v58 = vsel %vm56, %v40, %v53
  %v59 = vld [vmem:[%s1] sm:$0xff]
  %v60 = vld [vmem:[%s1 + $0x8] sm:$0xff]
  %v61 = vld [vmem:[%s1 + $0x10] sm:$0xff]
  %v62 = vld [vmem:[%s1 + $0x18] sm:$0xff]
  %v63 = vld [vmem:[%s1 + $0x20] sm:$0xff]
  %v64 = vld [vmem:[%s1 + $0x28] sm:$0xff]
  %v65 = vld [vmem:[%s1 + $0x30] sm:$0xff]
  %v66 = vld [vmem:[%s1 + $0x38] sm:$0xff]
  %v67 = vld [vmem:[%s1 + $0x40] sm:$0xff]
  %v68 = vld [vmem:[%s1 + $0x48] sm:$0xff]
  %v69 = vld [vmem:[%s1 + $0x50] sm:$0xff]
  %v70 = vld [vmem:[%s1 + $0x58] sm:$0xff]
  %v71 = vld [vmem:[%s1 + $0x60] sm:$0xff]
  %v72 = vld [vmem:[%s1 + $0x68] sm:$0xff]
  %v73 = vld [vmem:[%s1 + $0x70] sm:$0xff]
  %v74 = vld [vmem:[%s1 + $0x78] sm:$0xff]
  %v75 = vld [vmem:[%s1 + $0x80] sm:$0xff]
  %v76 = vld [vmem:[%s1 + $0x88] sm:$0xff]
  %v77 = vld [vmem:[%s1 + $0x90] sm:$0xff]
  %v78 = vld [vmem:[%s1 + $0x98] sm:$0xff]
  %v79 = vld [vmem:[%s1 + $0xa0] sm:$0xff]
  %v80 = vld [vmem:[%s1 + $0xa8] sm:$0xff]
  %v81 = vld [vmem:[%s1 + $0xb0] sm:$0xff]
  %v82 = vld [vmem:[%s1 + $0xb8] sm:$0xff]
  %v83 = vld [vmem:[%s1 + $0xc0] sm:$0x1]
  %v84 = vlaneseq
  %v85 = vshrl.u32 %v84, 7
  %v86 = vsub.s32 0, %v85
  %v87 = vrot.slane %v83, %v86
  %v89 = vsel %vm56, %v46, 0
  %v92 = vsel %vm56, %v47, 0
  %94 = vmatprep.subr.mxu0 0.0
  %95 = vmatpush1.msra.mxu0 %v74
  %96 = vmatprep.subr.mxu0 0.0
  %97 = vmatpush1.msra.mxu0 %v73
  %98 = vmatprep.subr.mxu0 0.0
  %99 = vmatpush1.msra.mxu0 %v72
  %100 = vmatprep.subr.mxu0 0.0
  %101 = vmatpush1.msra.mxu0 %v71
  %102 = vmatprep.subr.mxu0 0.0
  %103 = vmatpush1.msra.mxu0 %v70
  %104 = vmatprep.subr.mxu0 0.0
  %105 = vmatpush1.msra.mxu0 %v69
  %106 = vmatprep.subr.mxu0 0.0
  %107 = vmatpush1.msra.mxu0 %v68
  %108 = vmatprep.subr.mxu0 0.0
  %109 = vmatpush1.msra.mxu0 %v67
  %110 = vmatprep.subr.mxu0 0.0
  %111 = vmatpush1.msra.mxu0 %v66
  %112 = vmatprep.subr.mxu0 0.0
  %113 = vmatpush1.msra.mxu0 %v65
  %114 = vmatprep.subr.mxu0 0.0
  %115 = vmatpush1.msra.mxu0 %v64
  %116 = vmatprep.subr.mxu0 0.0
  %117 = vmatpush1.msra.mxu0 %v63
  %118 = vmatprep.subr.mxu0 0.0
  %119 = vmatpush1.msra.mxu0 %v62
  %120 = vmatprep.subr.mxu0 0.0
  %121 = vmatpush1.msra.mxu0 %v61
  %122 = vmatprep.subr.mxu0 0.0
  %123 = vmatpush1.msra.mxu0 %v60
  %124 = vmatprep.subr.mxu0 0.0
  %125 = vmatpush1.msra.mxu0 %v59
  %126 = vmatprep.subr.mxu0 0.0
  %127 = vmatpush2.msra.mxu0 0.0
  %128 = vmatprep.subr.mxu0 0.0
  %129 = vmatpush2.msra.mxu0 0.0
  %130 = vmatprep.subr.mxu0 0.0
  %131 = vmatpush2.msra.mxu0 0.0
  %132 = vmatprep.subr.mxu0 0.0
  %133 = vmatpush2.msra.mxu0 0.0
  %134 = vmatprep.subr.mxu0 0.0
  %135 = vmatpush2.msra.mxu0 0.0
  %136 = vmatprep.subr.mxu0 0.0
  %137 = vmatpush2.msra.mxu0 0.0
  %138 = vmatprep.subr.mxu0 0.0
  %139 = vmatpush2.msra.mxu0 0.0
  %140 = vmatprep.subr.mxu0 0.0
  %141 = vmatpush2.msra.mxu0 0.0
  %142 = vmatprep.subr.mxu0 0.0
  %143 = vmatpush2.msra.mxu0 %v82
  %144 = vmatprep.subr.mxu0 0.0
  %145 = vmatpush2.msra.mxu0 %v81
  %146 = vmatprep.subr.mxu0 0.0
  %147 = vmatpush2.msra.mxu0 %v80
  %148 = vmatprep.subr.mxu0 0.0
  %149 = vmatpush2.msra.mxu0 %v79
  %150 = vmatprep.subr.mxu0 0.0
  %151 = vmatpush2.msra.mxu0 %v78
  %152 = vmatprep.subr.mxu0 0.0
  %153 = vmatpush2.msra.mxu0 %v77
  %154 = vmatprep.subr.mxu0 0.0
  %155 = vmatpush2.msra.mxu0 %v76
  %156 = vmatprep.subr.mxu0 0.0
  %157 = vmatpush2.msra.mxu0 %v75
  %158 = vmatprep.mubr.f32.mxu0 %v89
  %159 = vmatmul.mubr.f32.gmra.mxu0 %v57
  %v160 = vpop.f32.mrf.mxu0
  %v161 = vadd.f32 %v87, %v160
  %v162 = vpop.f32.mrf.mxu0
  %163 = vmatprep.mubr.f32.mxu0 %v92
  %164 = vmatmul.mubr.f32.gmra.mxu0 %v58
  %v165 = vpop.f32.mrf.mxu0
  %v166 = vadd.f32 %v87, %v165
  %v167 = vpop.f32.mrf.mxu0
  %168 = vdwg.mxu0
  %v169 = vrot.slane %v161, 7
  %v170 = vrot.slane %v166, 7
  %v171 = vsel %vm36, %v169, %v170
  %v172 = vsel %vm36, %v170, %v169
  %v173 = vmul.f32 %v172, %v26
  %v174 = vmul.f32 %v171, %v27
  %v175 = vrot.slane %v161, 1
  %v176 = vrot.slane %v166, 1
  %v177 = vsel %vm43, %v175, %v176
  %v178 = vsel %vm43, %v176, %v175
  %v179 = vmul.f32 %v177, %v32
  %v180 = vmul.f32 %v178, %v33
  %183 = vrot.lane.b32.xlu0 %v161, 64
  %v184 = vpop.permute.xlu0 %183
  %185 = vrot.lane.b32.xlu0 %v166, 64
  %v186 = vpop.permute.xlu0 %185
  %v189 = vsel %vm56, %v173, %v184
  %v190 = vsel %vm56, %v174, %v186
  %s191 = scalar_lea.vmem %s1, 200
  %v192 = vld [vmem:[%s191] sm:$0xff]
  %v193 = vld [vmem:[%s191 + $0x8] sm:$0xff]
  %v194 = vld [vmem:[%s191 + $0x10] sm:$0xff]
  %v195 = vld [vmem:[%s191 + $0x18] sm:$0xff]
  %v196 = vld [vmem:[%s191 + $0x20] sm:$0xff]
  %v197 = vld [vmem:[%s191 + $0x28] sm:$0xff]
  %v198 = vld [vmem:[%s191 + $0x30] sm:$0xff]
  %v199 = vld [vmem:[%s191 + $0x38] sm:$0xff]
  %v200 = vld [vmem:[%s191 + $0x40] sm:$0xff]
  %v201 = vld [vmem:[%s191 + $0x48] sm:$0xff]
  %v202 = vld [vmem:[%s191 + $0x50] sm:$0xff]
  %v203 = vld [vmem:[%s191 + $0x58] sm:$0xff]
  %v204 = vld [vmem:[%s191 + $0x60] sm:$0xff]
  %v205 = vld [vmem:[%s191 + $0x68] sm:$0xff]
  %v206 = vld [vmem:[%s191 + $0x70] sm:$0xff]
  %v207 = vld [vmem:[%s191 + $0x78] sm:$0xff]
  %v208 = vld [vmem:[%s191 + $0x80] sm:$0xff]
  %v209 = vld [vmem:[%s191 + $0x88] sm:$0xff]
  %v210 = vld [vmem:[%s191 + $0x90] sm:$0xff]
  %v211 = vld [vmem:[%s191 + $0x98] sm:$0xff]
  %v212 = vld [vmem:[%s191 + $0xa0] sm:$0xff]
  %v213 = vld [vmem:[%s191 + $0xa8] sm:$0xff]
  %v214 = vld [vmem:[%s191 + $0xb0] sm:$0xff]
  %v215 = vld [vmem:[%s191 + $0xb8] sm:$0xff]
  %v216 = vld [vmem:[%s191 + $0xc0] sm:$0x1]
  %v217 = vlaneseq
  %v218 = vshrl.u32 %v217, 7
  %v219 = vsub.s32 0, %v218
  %v220 = vrot.slane %v216, %v219
  %v222 = vsel %vm56, %v179, 0
  %v225 = vsel %vm56, %v180, 0
  %227 = vmatprep.subr.mxu0 0.0
  %228 = vmatpush1.msra.mxu0 %v207
  %229 = vmatprep.subr.mxu0 0.0
  %230 = vmatpush1.msra.mxu0 %v206
  %231 = vmatprep.subr.mxu0 0.0
  %232 = vmatpush1.msra.mxu0 %v205
  %233 = vmatprep.subr.mxu0 0.0
  %234 = vmatpush1.msra.mxu0 %v204
  %235 = vmatprep.subr.mxu0 0.0
  %236 = vmatpush1.msra.mxu0 %v203
  %237 = vmatprep.subr.mxu0 0.0
  %238 = vmatpush1.msra.mxu0 %v202
  %239 = vmatprep.subr.mxu0 0.0
  %240 = vmatpush1.msra.mxu0 %v201
  %241 = vmatprep.subr.mxu0 0.0
  %242 = vmatpush1.msra.mxu0 %v200
  %243 = vmatprep.subr.mxu0 0.0
  %244 = vmatpush1.msra.mxu0 %v199
  %245 = vmatprep.subr.mxu0 0.0
  %246 = vmatpush1.msra.mxu0 %v198
  %247 = vmatprep.subr.mxu0 0.0
  %248 = vmatpush1.msra.mxu0 %v197
  %249 = vmatprep.subr.mxu0 0.0
  %250 = vmatpush1.msra.mxu0 %v196
  %251 = vmatprep.subr.mxu0 0.0
  %252 = vmatpush1.msra.mxu0 %v195
  %253 = vmatprep.subr.mxu0 0.0
  %254 = vmatpush1.msra.mxu0 %v194
  %255 = vmatprep.subr.mxu0 0.0
  %256 = vmatpush1.msra.mxu0 %v193
  %257 = vmatprep.subr.mxu0 0.0
  %258 = vmatpush1.msra.mxu0 %v192
  %259 = vmatprep.subr.mxu0 0.0
  %260 = vmatpush2.msra.mxu0 0.0
  %261 = vmatprep.subr.mxu0 0.0
  %262 = vmatpush2.msra.mxu0 0.0
  %263 = vmatprep.subr.mxu0 0.0
  %264 = vmatpush2.msra.mxu0 0.0
  %265 = vmatprep.subr.mxu0 0.0
  %266 = vmatpush2.msra.mxu0 0.0
  %267 = vmatprep.subr.mxu0 0.0
  %268 = vmatpush2.msra.mxu0 0.0
  %269 = vmatprep.subr.mxu0 0.0
  %270 = vmatpush2.msra.mxu0 0.0
  %271 = vmatprep.subr.mxu0 0.0
  %272 = vmatpush2.msra.mxu0 0.0
  %273 = vmatprep.subr.mxu0 0.0
  %274 = vmatpush2.msra.mxu0 0.0
  %275 = vmatprep.subr.mxu0 0.0
  %276 = vmatpush2.msra.mxu0 %v215
  %277 = vmatprep.subr.mxu0 0.0
  %278 = vmatpush2.msra.mxu0 %v214
  %279 = vmatprep.subr.mxu0 0.0
  %280 = vmatpush2.msra.mxu0 %v213
  %281 = vmatprep.subr.mxu0 0.0
  %282 = vmatpush2.msra.mxu0 %v212
  %283 = vmatprep.subr.mxu0 0.0
  %284 = vmatpush2.msra.mxu0 %v211
  %285 = vmatprep.subr.mxu0 0.0
  %286 = vmatpush2.msra.mxu0 %v210
  %287 = vmatprep.subr.mxu0 0.0
  %288 = vmatpush2.msra.mxu0 %v209
  %289 = vmatprep.subr.mxu0 0.0
  %290 = vmatpush2.msra.mxu0 %v208
  %291 = vmatprep.mubr.f32.mxu0 %v222
  %292 = vmatmul.mubr.f32.gmra.mxu0 %v189
  %v293 = vpop.f32.mrf.mxu0
  %v294 = vadd.f32 %v220, %v293
  %v295 = vpop.f32.mrf.mxu0
  %296 = vmatprep.mubr.f32.mxu0 %v225
  %297 = vmatmul.mubr.f32.gmra.mxu0 %v190
  %v298 = vpop.f32.mrf.mxu0
  %v299 = vadd.f32 %v220, %v298
  %v300 = vpop.f32.mrf.mxu0
  %301 = vdwg.mxu0
  %v302 = vmax.f32 %v294, 0.0
  %v303 = vmax.f32 %v299, 0.0
  %v304 = vrot.slane %v302, 7
  %v305 = vrot.slane %v303, 7
  %v306 = vsel %vm36, %v304, %v305
  %v307 = vsel %vm36, %v305, %v304
  %v308 = vmul.f32 %v307, %v26
  %v309 = vmul.f32 %v306, %v27
  %v310 = vrot.slane %v302, 1
  %v311 = vrot.slane %v303, 1
  %v312 = vsel %vm43, %v310, %v311
  %v313 = vsel %vm43, %v311, %v310
  %v314 = vmul.f32 %v312, %v32
  %v315 = vmul.f32 %v313, %v33
  %318 = vrot.lane.b32.xlu0 %v302, 64
  %v319 = vpop.permute.xlu0 %318
  %320 = vrot.lane.b32.xlu0 %v303, 64
  %v321 = vpop.permute.xlu0 %320
  %v324 = vsel %vm56, %v308, %v319
  %v325 = vsel %vm56, %v309, %v321
  %s326 = scalar_lea.vmem %s1, 400
  %v327 = vld [vmem:[%s326] sm:$0xff]
  %v328 = vld [vmem:[%s326 + $0x8] sm:$0xff]
  %v329 = vld [vmem:[%s326 + $0x10] sm:$0xff]
  %v330 = vld [vmem:[%s326 + $0x18] sm:$0xff]
  %v331 = vld [vmem:[%s326 + $0x20] sm:$0xff]
  %v332 = vld [vmem:[%s326 + $0x28] sm:$0xff]
  %v333 = vld [vmem:[%s326 + $0x30] sm:$0xff]
  %v334 = vld [vmem:[%s326 + $0x38] sm:$0xff]
  %v335 = vld [vmem:[%s326 + $0x40] sm:$0xff]
  %v336 = vld [vmem:[%s326 + $0x48] sm:$0xff]
  %v337 = vld [vmem:[%s326 + $0x50] sm:$0xff]
  %v338 = vld [vmem:[%s326 + $0x58] sm:$0xff]
  %v339 = vld [vmem:[%s326 + $0x60] sm:$0xff]
  %v340 = vld [vmem:[%s326 + $0x68] sm:$0xff]
  %v341 = vld [vmem:[%s326 + $0x70] sm:$0xff]
  %v342 = vld [vmem:[%s326 + $0x78] sm:$0xff]
  %v343 = vld [vmem:[%s326 + $0x80] sm:$0xff]
  %v344 = vld [vmem:[%s326 + $0x88] sm:$0xff]
  %v345 = vld [vmem:[%s326 + $0x90] sm:$0xff]
  %v346 = vld [vmem:[%s326 + $0x98] sm:$0xff]
  %v347 = vld [vmem:[%s326 + $0xa0] sm:$0xff]
  %v348 = vld [vmem:[%s326 + $0xa8] sm:$0xff]
  %v349 = vld [vmem:[%s326 + $0xb0] sm:$0xff]
  %v350 = vld [vmem:[%s326 + $0xb8] sm:$0xff]
  %v351 = vld [vmem:[%s326 + $0xc0] sm:$0x1]
  %v352 = vlaneseq
  %v353 = vshrl.u32 %v352, 7
  %v354 = vsub.s32 0, %v353
  %v355 = vrot.slane %v351, %v354
  %v357 = vsel %vm56, %v314, 0
  %v360 = vsel %vm56, %v315, 0
  %362 = vmatprep.subr.mxu0 0.0
  %363 = vmatpush1.msra.mxu0 %v342
  %364 = vmatprep.subr.mxu0 0.0
  %365 = vmatpush1.msra.mxu0 %v341
  %366 = vmatprep.subr.mxu0 0.0
  %367 = vmatpush1.msra.mxu0 %v340
  %368 = vmatprep.subr.mxu0 0.0
  %369 = vmatpush1.msra.mxu0 %v339
  %370 = vmatprep.subr.mxu0 0.0
  %371 = vmatpush1.msra.mxu0 %v338
  %372 = vmatprep.subr.mxu0 0.0
  %373 = vmatpush1.msra.mxu0 %v337
  %374 = vmatprep.subr.mxu0 0.0
  %375 = vmatpush1.msra.mxu0 %v336
  %376 = vmatprep.subr.mxu0 0.0
  %377 = vmatpush1.msra.mxu0 %v335
  %378 = vmatprep.subr.mxu0 0.0
  %379 = vmatpush1.msra.mxu0 %v334
  %380 = vmatprep.subr.mxu0 0.0
  %381 = vmatpush1.msra.mxu0 %v333
  %382 = vmatprep.subr.mxu0 0.0
  %383 = vmatpush1.msra.mxu0 %v332
  %384 = vmatprep.subr.mxu0 0.0
  %385 = vmatpush1.msra.mxu0 %v331
  %386 = vmatprep.subr.mxu0 0.0
  %387 = vmatpush1.msra.mxu0 %v330
  %388 = vmatprep.subr.mxu0 0.0
  %389 = vmatpush1.msra.mxu0 %v329
  %390 = vmatprep.subr.mxu0 0.0
  %391 = vmatpush1.msra.mxu0 %v328
  %392 = vmatprep.subr.mxu0 0.0
  %393 = vmatpush1.msra.mxu0 %v327
  %394 = vmatprep.subr.mxu0 0.0
  %395 = vmatpush2.msra.mxu0 0.0
  %396 = vmatprep.subr.mxu0 0.0
  %397 = vmatpush2.msra.mxu0 0.0
  %398 = vmatprep.subr.mxu0 0.0
  %399 = vmatpush2.msra.mxu0 0.0
  %400 = vmatprep.subr.mxu0 0.0
  %401 = vmatpush2.msra.mxu0 0.0
  %402 = vmatprep.subr.mxu0 0.0
  %403 = vmatpush2.msra.mxu0 0.0
  %404 = vmatprep.subr.mxu0 0.0
  %405 = vmatpush2.msra.mxu0 0.0
  %406 = vmatprep.subr.mxu0 0.0
  %407 = vmatpush2.msra.mxu0 0.0
  %408 = vmatprep.subr.mxu0 0.0
  %409 = vmatpush2.msra.mxu0 0.0
  %410 = vmatprep.subr.mxu0 0.0
  %411 = vmatpush2.msra.mxu0 %v350
  %412 = vmatprep.subr.mxu0 0.0
  %413 = vmatpush2.msra.mxu0 %v349
  %414 = vmatprep.subr.mxu0 0.0
  %415 = vmatpush2.msra.mxu0 %v348
  %416 = vmatprep.subr.mxu0 0.0
  %417 = vmatpush2.msra.mxu0 %v347
  %418 = vmatprep.subr.mxu0 0.0
  %419 = vmatpush2.msra.mxu0 %v346
  %420 = vmatprep.subr.mxu0 0.0
  %421 = vmatpush2.msra.mxu0 %v345
  %422 = vmatprep.subr.mxu0 0.0
  %423 = vmatpush2.msra.mxu0 %v344
  %424 = vmatprep.subr.mxu0 0.0
  %425 = vmatpush2.msra.mxu0 %v343
  %426 = vmatprep.mubr.f32.mxu0 %v357
  %427 = vmatmul.mubr.f32.gmra.mxu0 %v324
  %v428 = vpop.f32.mrf.mxu0
  %v429 = vadd.f32 %v355, %v428
  %v430 = vpop.f32.mrf.mxu0
  %431 = vmatprep.mubr.f32.mxu0 %v360
  %432 = vmatmul.mubr.f32.gmra.mxu0 %v325
  %v433 = vpop.f32.mrf.mxu0
  %v434 = vadd.f32 %v355, %v433
  %v435 = vpop.f32.mrf.mxu0
  %436 = vdwg.mxu0
  %v437 = vmax.f32 %v429, 0.0
  %v438 = vmax.f32 %v434, 0.0
  %v439 = vadd.f32 %v437, %v161
  %v440 = vadd.f32 %v438, %v166
  %vm441 = vcmp.ge.f32.partialorder %v439, 0.0
  %vm442 = vcmp.ge.f32.partialorder %v440, 0.0
  %v443 = vmul.f32 %v439, 0.22916667
  %v444 = vmul.f32 %v440, 0.22916667
  %v445 = vsel %vm441, %v439, %v443
  %v446 = vsel %vm442, %v440, %v444
  %v447 = vrot.slane %v445, 7
  %v448 = vrot.slane %v446, 7
  %v449 = vsel %vm36, %v447, %v448
  %v450 = vsel %vm36, %v448, %v447
  %v451 = vmul.f32 %v450, %v26
  %v452 = vmul.f32 %v449, %v27
  %v453 = vrot.slane %v445, 1
  %v454 = vrot.slane %v446, 1
  %v455 = vsel %vm43, %v453, %v454
  %v456 = vsel %vm43, %v454, %v453
  %v457 = vmul.f32 %v455, %v32
  %v458 = vmul.f32 %v456, %v33
  %461 = vrot.lane.b32.xlu0 %v445, 64
  %v462 = vpop.permute.xlu0 %461
  %463 = vrot.lane.b32.xlu0 %v446, 64
  %v464 = vpop.permute.xlu0 %463
  %v467 = vsel %vm56, %v451, %v462
  %v468 = vsel %vm56, %v452, %v464
  %s469 = scalar_lea.vmem %s1, 600
  %v470 = vld [vmem:[%s469] sm:$0xff]
  %v471 = vld [vmem:[%s469 + $0x8] sm:$0xff]
  %v472 = vld [vmem:[%s469 + $0x10] sm:$0xff]
  %v473 = vld [vmem:[%s469 + $0x18] sm:$0xff]
  %v474 = vld [vmem:[%s469 + $0x20] sm:$0xff]
  %v475 = vld [vmem:[%s469 + $0x28] sm:$0xff]
  %v476 = vld [vmem:[%s469 + $0x30] sm:$0xff]
  %v477 = vld [vmem:[%s469 + $0x38] sm:$0xff]
  %v478 = vld [vmem:[%s469 + $0x40] sm:$0xff]
  %v479 = vld [vmem:[%s469 + $0x48] sm:$0xff]
  %v480 = vld [vmem:[%s469 + $0x50] sm:$0xff]
  %v481 = vld [vmem:[%s469 + $0x58] sm:$0xff]
  %v482 = vld [vmem:[%s469 + $0x60] sm:$0xff]
  %v483 = vld [vmem:[%s469 + $0x68] sm:$0xff]
  %v484 = vld [vmem:[%s469 + $0x70] sm:$0xff]
  %v485 = vld [vmem:[%s469 + $0x78] sm:$0xff]
  %v486 = vld [vmem:[%s469 + $0x80] sm:$0xff]
  %v487 = vld [vmem:[%s469 + $0x88] sm:$0xff]
  %v488 = vld [vmem:[%s469 + $0x90] sm:$0xff]
  %v489 = vld [vmem:[%s469 + $0x98] sm:$0xff]
  %v490 = vld [vmem:[%s469 + $0xa0] sm:$0xff]
  %v491 = vld [vmem:[%s469 + $0xa8] sm:$0xff]
  %v492 = vld [vmem:[%s469 + $0xb0] sm:$0xff]
  %v493 = vld [vmem:[%s469 + $0xb8] sm:$0xff]
  %v494 = vld [vmem:[%s469 + $0xc0] sm:$0x1]
  %v495 = vlaneseq
  %v496 = vshrl.u32 %v495, 7
  %v497 = vsub.s32 0, %v496
  %v498 = vrot.slane %v494, %v497
  %v500 = vsel %vm56, %v457, 0
  %v503 = vsel %vm56, %v458, 0
  %505 = vmatprep.subr.mxu0 0.0
  %506 = vmatpush1.msra.mxu0 %v485
  %507 = vmatprep.subr.mxu0 0.0
  %508 = vmatpush1.msra.mxu0 %v484
  %509 = vmatprep.subr.mxu0 0.0
  %510 = vmatpush1.msra.mxu0 %v483
  %511 = vmatprep.subr.mxu0 0.0
  %512 = vmatpush1.msra.mxu0 %v482
  %513 = vmatprep.subr.mxu0 0.0
  %514 = vmatpush1.msra.mxu0 %v481
  %515 = vmatprep.subr.mxu0 0.0
  %516 = vmatpush1.msra.mxu0 %v480
  %517 = vmatprep.subr.mxu0 0.0
  %518 = vmatpush1.msra.mxu0 %v479
  %519 = vmatprep.subr.mxu0 0.0
  %520 = vmatpush1.msra.mxu0 %v478
  %521 = vmatprep.subr.mxu0 0.0
  %522 = vmatpush1.msra.mxu0 %v477
  %523 = vmatprep.subr.mxu0 0.0
  %524 = vmatpush1.msra.mxu0 %v476
  %525 = vmatprep.subr.mxu0 0.0
  %526 = vmatpush1.msra.mxu0 %v475
  %527 = vmatprep.subr.mxu0 0.0
  %528 = vmatpush1.msra.mxu0 %v474
  %529 = vmatprep.subr.mxu0 0.0
  %530 = vmatpush1.msra.mxu0 %v473
  %531 = vmatprep.subr.mxu0 0.0
  %532 = vmatpush1.msra.mxu0 %v472
  %533 = vmatprep.subr.mxu0 0.0
  %534 = vmatpush1.msra.mxu0 %v471
  %535 = vmatprep.subr.mxu0 0.0
  %536 = vmatpush1.msra.mxu0 %v470
  %537 = vmatprep.subr.mxu0 0.0
  %538 = vmatpush2.msra.mxu0 0.0
  %539 = vmatprep.subr.mxu0 0.0
  %540 = vmatpush2.msra.mxu0 0.0
  %541 = vmatprep.subr.mxu0 0.0
  %542 = vmatpush2.msra.mxu0 0.0
  %543 = vmatprep.subr.mxu0 0.0
  %544 = vmatpush2.msra.mxu0 0.0
  %545 = vmatprep.subr.mxu0 0.0
  %546 = vmatpush2.msra.mxu0 0.0
  %547 = vmatprep.subr.mxu0 0.0
  %548 = vmatpush2.msra.mxu0 0.0
  %549 = vmatprep.subr.mxu0 0.0
  %550 = vmatpush2.msra.mxu0 0.0
  %551 = vmatprep.subr.mxu0 0.0
  %552 = vmatpush2.msra.mxu0 0.0
  %553 = vmatprep.subr.mxu0 0.0
  %554 = vmatpush2.msra.mxu0 %v493
  %555 = vmatprep.subr.mxu0 0.0
  %556 = vmatpush2.msra.mxu0 %v492
  %557 = vmatprep.subr.mxu0 0.0
  %558 = vmatpush2.msra.mxu0 %v491
  %559 = vmatprep.subr.mxu0 0.0
  %560 = vmatpush2.msra.mxu0 %v490
  %561 = vmatprep.subr.mxu0 0.0
  %562 = vmatpush2.msra.mxu0 %v489
  %563 = vmatprep.subr.mxu0 0.0
  %564 = vmatpush2.msra.mxu0 %v488
  %565 = vmatprep.subr.mxu0 0.0
  %566 = vmatpush2.msra.mxu0 %v487
  %567 = vmatprep.subr.mxu0 0.0
  %568 = vmatpush2.msra.mxu0 %v486
  %569 = vmatprep.mubr.f32.mxu0 %v500
  %570 = vmatmul.mubr.f32.gmra.mxu0 %v467
  %v571 = vpop.f32.mrf.mxu0
  %v572 = vadd.f32 %v498, %v571
  %v573 = vpop.f32.mrf.mxu0
  %574 = vmatprep.mubr.f32.mxu0 %v503
  %575 = vmatmul.mubr.f32.gmra.mxu0 %v468
  %v576 = vpop.f32.mrf.mxu0
  %v577 = vadd.f32 %v498, %v576
  %v578 = vpop.f32.mrf.mxu0
  %579 = vdwg.mxu0
  %v580 = vmax.f32 %v572, 0.0
  %v581 = vmax.f32 %v577, 0.0
  %v582 = vrot.slane %v580, 7
  %v583 = vrot.slane %v581, 7
  %v584 = vsel %vm36, %v582, %v583
  %v585 = vsel %vm36, %v583, %v582
  %v586 = vmul.f32 %v585, %v26
  %v587 = vmul.f32 %v584, %v27
  %v588 = vrot.slane %v580, 1
  %v589 = vrot.slane %v581, 1
  %v590 = vsel %vm43, %v588, %v589
  %v591 = vsel %vm43, %v589, %v588
  %v592 = vmul.f32 %v590, %v32
  %v593 = vmul.f32 %v591, %v33
  %596 = vrot.lane.b32.xlu0 %v580, 64
  %v597 = vpop.permute.xlu0 %596
  %598 = vrot.lane.b32.xlu0 %v581, 64
  %v599 = vpop.permute.xlu0 %598
  %v602 = vsel %vm56, %v586, %v597
  %v603 = vsel %vm56, %v587, %v599
  %s604 = scalar_lea.vmem %s1, 800
  %v605 = vld [vmem:[%s604] sm:$0xff]
  %v606 = vld [vmem:[%s604 + $0x8] sm:$0xff]
  %v607 = vld [vmem:[%s604 + $0x10] sm:$0xff]
  %v608 = vld [vmem:[%s604 + $0x18] sm:$0xff]
  %v609 = vld [vmem:[%s604 + $0x20] sm:$0xff]
  %v610 = vld [vmem:[%s604 + $0x28] sm:$0xff]
  %v611 = vld [vmem:[%s604 + $0x30] sm:$0xff]
  %v612 = vld [vmem:[%s604 + $0x38] sm:$0xff]
  %v613 = vld [vmem:[%s604 + $0x40] sm:$0xff]
  %v614 = vld [vmem:[%s604 + $0x48] sm:$0xff]
  %v615 = vld [vmem:[%s604 + $0x50] sm:$0xff]
  %v616 = vld [vmem:[%s604 + $0x58] sm:$0xff]
  %v617 = vld [vmem:[%s604 + $0x60] sm:$0xff]
  %v618 = vld [vmem:[%s604 + $0x68] sm:$0xff]
  %v619 = vld [vmem:[%s604 + $0x70] sm:$0xff]
  %v620 = vld [vmem:[%s604 + $0x78] sm:$0xff]
  %v621 = vld [vmem:[%s604 + $0x80] sm:$0xff]
  %v622 = vld [vmem:[%s604 + $0x88] sm:$0xff]
  %v623 = vld [vmem:[%s604 + $0x90] sm:$0xff]
  %v624 = vld [vmem:[%s604 + $0x98] sm:$0xff]
  %v625 = vld [vmem:[%s604 + $0xa0] sm:$0xff]
  %v626 = vld [vmem:[%s604 + $0xa8] sm:$0xff]
  %v627 = vld [vmem:[%s604 + $0xb0] sm:$0xff]
  %v628 = vld [vmem:[%s604 + $0xb8] sm:$0xff]
  %v629 = vld [vmem:[%s604 + $0xc0] sm:$0x1]
  %v630 = vlaneseq
  %v631 = vshrl.u32 %v630, 7
  %v632 = vsub.s32 0, %v631
  %v633 = vrot.slane %v629, %v632
  %v635 = vsel %vm56, %v592, 0
  %v638 = vsel %vm56, %v593, 0
  %640 = vmatprep.subr.mxu0 0.0
  %641 = vmatpush1.msra.mxu0 %v620
  %642 = vmatprep.subr.mxu0 0.0
  %643 = vmatpush1.msra.mxu0 %v619
  %644 = vmatprep.subr.mxu0 0.0
  %645 = vmatpush1.msra.mxu0 %v618
  %646 = vmatprep.subr.mxu0 0.0
  %647 = vmatpush1.msra.mxu0 %v617
  %648 = vmatprep.subr.mxu0 0.0
  %649 = vmatpush1.msra.mxu0 %v616
  %650 = vmatprep.subr.mxu0 0.0
  %651 = vmatpush1.msra.mxu0 %v615
  %652 = vmatprep.subr.mxu0 0.0
  %653 = vmatpush1.msra.mxu0 %v614
  %654 = vmatprep.subr.mxu0 0.0
  %655 = vmatpush1.msra.mxu0 %v613
  %656 = vmatprep.subr.mxu0 0.0
  %657 = vmatpush1.msra.mxu0 %v612
  %658 = vmatprep.subr.mxu0 0.0
  %659 = vmatpush1.msra.mxu0 %v611
  %660 = vmatprep.subr.mxu0 0.0
  %661 = vmatpush1.msra.mxu0 %v610
  %662 = vmatprep.subr.mxu0 0.0
  %663 = vmatpush1.msra.mxu0 %v609
  %664 = vmatprep.subr.mxu0 0.0
  %665 = vmatpush1.msra.mxu0 %v608
  %666 = vmatprep.subr.mxu0 0.0
  %667 = vmatpush1.msra.mxu0 %v607
  %668 = vmatprep.subr.mxu0 0.0
  %669 = vmatpush1.msra.mxu0 %v606
  %670 = vmatprep.subr.mxu0 0.0
  %671 = vmatpush1.msra.mxu0 %v605
  %672 = vmatprep.subr.mxu0 0.0
  %673 = vmatpush2.msra.mxu0 0.0
  %674 = vmatprep.subr.mxu0 0.0
  %675 = vmatpush2.msra.mxu0 0.0
  %676 = vmatprep.subr.mxu0 0.0
  %677 = vmatpush2.msra.mxu0 0.0
  %678 = vmatprep.subr.mxu0 0.0
  %679 = vmatpush2.msra.mxu0 0.0
  %680 = vmatprep.subr.mxu0 0.0
  %681 = vmatpush2.msra.mxu0 0.0
  %682 = vmatprep.subr.mxu0 0.0
  %683 = vmatpush2.msra.mxu0 0.0
  %684 = vmatprep.subr.mxu0 0.0
  %685 = vmatpush2.msra.mxu0 0.0
  %686 = vmatprep.subr.mxu0 0.0
  %687 = vmatpush2.msra.mxu0 0.0
  %688 = vmatprep.subr.mxu0 0.0
  %689 = vmatpush2.msra.mxu0 %v628
  %690 = vmatprep.subr.mxu0 0.0
  %691 = vmatpush2.msra.mxu0 %v627
  %692 = vmatprep.subr.mxu0 0.0
  %693 = vmatpush2.msra.mxu0 %v626
  %694 = vmatprep.subr.mxu0 0.0
  %695 = vmatpush2.msra.mxu0 %v625
  %696 = vmatprep.subr.mxu0 0.0
  %697 = vmatpush2.msra.mxu0 %v624
  %698 = vmatprep.subr.mxu0 0.0
  %699 = vmatpush2.msra.mxu0 %v623
  %700 = vmatprep.subr.mxu0 0.0
  %701 = vmatpush2.msra.mxu0 %v622
  %702 = vmatprep.subr.mxu0 0.0
  %703 = vmatpush2.msra.mxu0 %v621
  %704 = vmatprep.mubr.f32.mxu0 %v635
  %705 = vmatmul.mubr.f32.gmra.mxu0 %v602
  %v706 = vpop.f32.mrf.mxu0
  %v707 = vadd.f32 %v633, %v706
  %v708 = vpop.f32.mrf.mxu0
  %709 = vmatprep.mubr.f32.mxu0 %v638
  %710 = vmatmul.mubr.f32.gmra.mxu0 %v603
  %v711 = vpop.f32.mrf.mxu0
  %v712 = vadd.f32 %v633, %v711
  %v713 = vpop.f32.mrf.mxu0
  %714 = vdwg.mxu0
  %v715 = vmax.f32 %v707, 0.0
  %v716 = vmax.f32 %v712, 0.0
  %v717 = vadd.f32 %v715, %v445
  %v718 = vadd.f32 %v716, %v446
  %vm719 = vcmp.ge.f32.partialorder %v717, 0.0
  %vm720 = vcmp.ge.f32.partialorder %v718, 0.0
  %v721 = vmul.f32 %v717, 0.22916667
  %v722 = vmul.f32 %v718, 0.22916667
  %v723 = vsel %vm719, %v717, %v721
  %v724 = vsel %vm720, %v718, %v722
  %v725 = vadd.f32 %v723, %v161
  %v726 = vadd.f32 %v724, %v166
  %v727 = vrot.slane %v725, 7
  %v728 = vrot.slane %v726, 7
  %v729 = vsel %vm36, %v727, %v728
  %v730 = vsel %vm36, %v728, %v727
  %v731 = vmul.f32 %v730, %v26
  %v732 = vmul.f32 %v729, %v27
  %v733 = vrot.slane %v725, 1
  %v734 = vrot.slane %v726, 1
  %v735 = vsel %vm43, %v733, %v734
  %v736 = vsel %vm43, %v734, %v733
  %v737 = vmul.f32 %v735, %v32
  %v738 = vmul.f32 %v736, %v33
  %741 = vrot.lane.b32.xlu0 %v725, 64
  %v742 = vpop.permute.xlu0 %741
  %743 = vrot.lane.b32.xlu0 %v726, 64
  %v744 = vpop.permute.xlu0 %743
  %v747 = vsel %vm56, %v731, %v742
  %v748 = vsel %vm56, %v732, %v744
  %s749 = scalar_lea.vmem %s1, 1000
  %v750 = vld [vmem:[%s749] sm:$0xff]
  %v751 = vld [vmem:[%s749 + $0x8] sm:$0xff]
  %v752 = vld [vmem:[%s749 + $0x10] sm:$0xff]
  %v753 = vld [vmem:[%s749 + $0x18] sm:$0xff]
  %v754 = vld [vmem:[%s749 + $0x20] sm:$0xff]
  %v755 = vld [vmem:[%s749 + $0x28] sm:$0xff]
  %v756 = vld [vmem:[%s749 + $0x30] sm:$0xff]
  %v757 = vld [vmem:[%s749 + $0x38] sm:$0xff]
  %v758 = vld [vmem:[%s749 + $0x40] sm:$0xff]
  %v759 = vld [vmem:[%s749 + $0x48] sm:$0xff]
  %v760 = vld [vmem:[%s749 + $0x50] sm:$0xff]
  %v761 = vld [vmem:[%s749 + $0x58] sm:$0xff]
  %v762 = vld [vmem:[%s749 + $0x60] sm:$0xff]
  %v763 = vld [vmem:[%s749 + $0x68] sm:$0xff]
  %v764 = vld [vmem:[%s749 + $0x70] sm:$0xff]
  %v765 = vld [vmem:[%s749 + $0x78] sm:$0xff]
  %v766 = vld [vmem:[%s749 + $0x80] sm:$0xff]
  %v767 = vld [vmem:[%s749 + $0x88] sm:$0xff]
  %v768 = vld [vmem:[%s749 + $0x90] sm:$0xff]
  %v769 = vld [vmem:[%s749 + $0x98] sm:$0xff]
  %v770 = vld [vmem:[%s749 + $0xa0] sm:$0xff]
  %v771 = vld [vmem:[%s749 + $0xa8] sm:$0xff]
  %v772 = vld [vmem:[%s749 + $0xb0] sm:$0xff]
  %v773 = vld [vmem:[%s749 + $0xb8] sm:$0xff]
  %v774 = vld [vmem:[%s749 + $0xc0] sm:$0x1]
  %v775 = vlaneseq
  %v776 = vshrl.u32 %v775, 7
  %v777 = vsub.s32 0, %v776
  %v778 = vrot.slane %v774, %v777
  %v780 = vsel %vm56, %v737, 0
  %v783 = vsel %vm56, %v738, 0
  %785 = vmatprep.subr.mxu0 0.0
  %786 = vmatpush1.msra.mxu0 %v765
  %787 = vmatprep.subr.mxu0 0.0
  %788 = vmatpush1.msra.mxu0 %v764
  %789 = vmatprep.subr.mxu0 0.0
  %790 = vmatpush1.msra.mxu0 %v763
  %791 = vmatprep.subr.mxu0 0.0
  %792 = vmatpush1.msra.mxu0 %v762
  %793 = vmatprep.subr.mxu0 0.0
  %794 = vmatpush1.msra.mxu0 %v761
  %795 = vmatprep.subr.mxu0 0.0
  %796 = vmatpush1.msra.mxu0 %v760
  %797 = vmatprep.subr.mxu0 0.0
  %798 = vmatpush1.msra.mxu0 %v759
  %799 = vmatprep.subr.mxu0 0.0
  %800 = vmatpush1.msra.mxu0 %v758
  %801 = vmatprep.subr.mxu0 0.0
  %802 = vmatpush1.msra.mxu0 %v757
  %803 = vmatprep.subr.mxu0 0.0
  %804 = vmatpush1.msra.mxu0 %v756
  %805 = vmatprep.subr.mxu0 0.0
  %806 = vmatpush1.msra.mxu0 %v755
  %807 = vmatprep.subr.mxu0 0.0
  %808 = vmatpush1.msra.mxu0 %v754
  %809 = vmatprep.subr.mxu0 0.0
  %810 = vmatpush1.msra.mxu0 %v753
  %811 = vmatprep.subr.mxu0 0.0
  %812 = vmatpush1.msra.mxu0 %v752
  %813 = vmatprep.subr.mxu0 0.0
  %814 = vmatpush1.msra.mxu0 %v751
  %815 = vmatprep.subr.mxu0 0.0
  %816 = vmatpush1.msra.mxu0 %v750
  %817 = vmatprep.subr.mxu0 0.0
  %818 = vmatpush2.msra.mxu0 0.0
  %819 = vmatprep.subr.mxu0 0.0
  %820 = vmatpush2.msra.mxu0 0.0
  %821 = vmatprep.subr.mxu0 0.0
  %822 = vmatpush2.msra.mxu0 0.0
  %823 = vmatprep.subr.mxu0 0.0
  %824 = vmatpush2.msra.mxu0 0.0
  %825 = vmatprep.subr.mxu0 0.0
  %826 = vmatpush2.msra.mxu0 0.0
  %827 = vmatprep.subr.mxu0 0.0
  %828 = vmatpush2.msra.mxu0 0.0
  %829 = vmatprep.subr.mxu0 0.0
  %830 = vmatpush2.msra.mxu0 0.0
  %831 = vmatprep.subr.mxu0 0.0
  %832 = vmatpush2.msra.mxu0 0.0
  %833 = vmatprep.subr.mxu0 0.0
  %834 = vmatpush2.msra.mxu0 %v773
  %835 = vmatprep.subr.mxu0 0.0
  %836 = vmatpush2.msra.mxu0 %v772
  %837 = vmatprep.subr.mxu0 0.0
  %838 = vmatpush2.msra.mxu0 %v771
  %839 = vmatprep.subr.mxu0 0.0
  %840 = vmatpush2.msra.mxu0 %v770
  %841 = vmatprep.subr.mxu0 0.0
  %842 = vmatpush2.msra.mxu0 %v769
  %843 = vmatprep.subr.mxu0 0.0
  %844 = vmatpush2.msra.mxu0 %v768
  %845 = vmatprep.subr.mxu0 0.0
  %846 = vmatpush2.msra.mxu0 %v767
  %847 = vmatprep.subr.mxu0 0.0
  %848 = vmatpush2.msra.mxu0 %v766
  %849 = vmatprep.mubr.f32.mxu0 %v780
  %850 = vmatmul.mubr.f32.gmra.mxu0 %v747
  %v851 = vpop.f32.mrf.mxu0
  %v852 = vadd.f32 %v778, %v851
  %v853 = vpop.f32.mrf.mxu0
  %854 = vmatprep.mubr.f32.mxu0 %v783
  %855 = vmatmul.mubr.f32.gmra.mxu0 %v748
  %v856 = vpop.f32.mrf.mxu0
  %v857 = vadd.f32 %v778, %v856
  %v858 = vpop.f32.mrf.mxu0
  %859 = vdwg.mxu0
  %v860 = vmax.f32 %v852, 0.0
  %v861 = vmax.f32 %v857, 0.0
  %v862 = vrot.slane %v860, 7
  %v863 = vrot.slane %v861, 7
  %v864 = vsel %vm36, %v862, %v863
  %v865 = vsel %vm36, %v863, %v862
  %v866 = vmul.f32 %v865, %v26
  %v867 = vmul.f32 %v864, %v27
  %v868 = vrot.slane %v860, 1
  %v869 = vrot.slane %v861, 1
  %v870 = vsel %vm43, %v868, %v869
  %v871 = vsel %vm43, %v869, %v868
  %v872 = vmul.f32 %v870, %v32
  %v873 = vmul.f32 %v871, %v33
  %876 = vrot.lane.b32.xlu0 %v860, 64
  %v877 = vpop.permute.xlu0 %876
  %878 = vrot.lane.b32.xlu0 %v861, 64
  %v879 = vpop.permute.xlu0 %878
  %v882 = vsel %vm56, %v866, %v877
  %v883 = vsel %vm56, %v867, %v879
  %s884 = scalar_lea.vmem %s1, 1200
  %v885 = vld [vmem:[%s884] sm:$0xff]
  %v886 = vld [vmem:[%s884 + $0x8] sm:$0xff]
  %v887 = vld [vmem:[%s884 + $0x10] sm:$0xff]
  %v888 = vld [vmem:[%s884 + $0x18] sm:$0xff]
  %v889 = vld [vmem:[%s884 + $0x20] sm:$0xff]
  %v890 = vld [vmem:[%s884 + $0x28] sm:$0xff]
  %v891 = vld [vmem:[%s884 + $0x30] sm:$0xff]
  %v892 = vld [vmem:[%s884 + $0x38] sm:$0xff]
  %v893 = vld [vmem:[%s884 + $0x40] sm:$0xff]
  %v894 = vld [vmem:[%s884 + $0x48] sm:$0xff]
  %v895 = vld [vmem:[%s884 + $0x50] sm:$0xff]
  %v896 = vld [vmem:[%s884 + $0x58] sm:$0xff]
  %v897 = vld [vmem:[%s884 + $0x60] sm:$0xff]
  %v898 = vld [vmem:[%s884 + $0x68] sm:$0xff]
  %v899 = vld [vmem:[%s884 + $0x70] sm:$0xff]
  %v900 = vld [vmem:[%s884 + $0x78] sm:$0xff]
  %v901 = vld [vmem:[%s884 + $0x80] sm:$0xff]
  %v902 = vld [vmem:[%s884 + $0x88] sm:$0xff]
  %v903 = vld [vmem:[%s884 + $0x90] sm:$0xff]
  %v904 = vld [vmem:[%s884 + $0x98] sm:$0xff]
  %v905 = vld [vmem:[%s884 + $0xa0] sm:$0xff]
  %v906 = vld [vmem:[%s884 + $0xa8] sm:$0xff]
  %v907 = vld [vmem:[%s884 + $0xb0] sm:$0xff]
  %v908 = vld [vmem:[%s884 + $0xb8] sm:$0xff]
  %v909 = vld [vmem:[%s884 + $0xc0] sm:$0x1]
  %v910 = vlaneseq
  %v911 = vshrl.u32 %v910, 7
  %v912 = vsub.s32 0, %v911
  %v913 = vrot.slane %v909, %v912
  %v915 = vsel %vm56, %v872, 0
  %v918 = vsel %vm56, %v873, 0
  %920 = vmatprep.subr.mxu0 0.0
  %921 = vmatpush1.msra.mxu0 %v900
  %922 = vmatprep.subr.mxu0 0.0
  %923 = vmatpush1.msra.mxu0 %v899
  %924 = vmatprep.subr.mxu0 0.0
  %925 = vmatpush1.msra.mxu0 %v898
  %926 = vmatprep.subr.mxu0 0.0
  %927 = vmatpush1.msra.mxu0 %v897
  %928 = vmatprep.subr.mxu0 0.0
  %929 = vmatpush1.msra.mxu0 %v896
  %930 = vmatprep.subr.mxu0 0.0
  %931 = vmatpush1.msra.mxu0 %v895
  %932 = vmatprep.subr.mxu0 0.0
  %933 = vmatpush1.msra.mxu0 %v894
  %934 = vmatprep.subr.mxu0 0.0
  %935 = vmatpush1.msra.mxu0 %v893
  %936 = vmatprep.subr.mxu0 0.0
  %937 = vmatpush1.msra.mxu0 %v892
  %938 = vmatprep.subr.mxu0 0.0
  %939 = vmatpush1.msra.mxu0 %v891
  %940 = vmatprep.subr.mxu0 0.0
  %941 = vmatpush1.msra.mxu0 %v890
  %942 = vmatprep.subr.mxu0 0.0
  %943 = vmatpush1.msra.mxu0 %v889
  %944 = vmatprep.subr.mxu0 0.0
  %945 = vmatpush1.msra.mxu0 %v888
  %946 = vmatprep.subr.mxu0 0.0
  %947 = vmatpush1.msra.mxu0 %v887
  %948 = vmatprep.subr.mxu0 0.0
  %949 = vmatpush1.msra.mxu0 %v886
  %950 = vmatprep.subr.mxu0 0.0
  %951 = vmatpush1.msra.mxu0 %v885
  %952 = vmatprep.subr.mxu0 0.0
  %953 = vmatpush2.msra.mxu0 0.0
  %954 = vmatprep.subr.mxu0 0.0
  %955 = vmatpush2.msra.mxu0 0.0
  %956 = vmatprep.subr.mxu0 0.0
  %957 = vmatpush2.msra.mxu0 0.0
  %958 = vmatprep.subr.mxu0 0.0
  %959 = vmatpush2.msra.mxu0 0.0
  %960 = vmatprep.subr.mxu0 0.0
  %961 = vmatpush2.msra.mxu0 0.0
  %962 = vmatprep.subr.mxu0 0.0
  %963 = vmatpush2.msra.mxu0 0.0
  %964 = vmatprep.subr.mxu0 0.0
  %965 = vmatpush2.msra.mxu0 0.0
  %966 = vmatprep.subr.mxu0 0.0
  %967 = vmatpush2.msra.mxu0 0.0
  %968 = vmatprep.subr.mxu0 0.0
  %969 = vmatpush2.msra.mxu0 %v908
  %970 = vmatprep.subr.mxu0 0.0
  %971 = vmatpush2.msra.mxu0 %v907
  %972 = vmatprep.subr.mxu0 0.0
  %973 = vmatpush2.msra.mxu0 %v906
  %974 = vmatprep.subr.mxu0 0.0
  %975 = vmatpush2.msra.mxu0 %v905
  %976 = vmatprep.subr.mxu0 0.0
  %977 = vmatpush2.msra.mxu0 %v904
  %978 = vmatprep.subr.mxu0 0.0
  %979 = vmatpush2.msra.mxu0 %v903
  %980 = vmatprep.subr.mxu0 0.0
  %981 = vmatpush2.msra.mxu0 %v902
  %982 = vmatprep.subr.mxu0 0.0
  %983 = vmatpush2.msra.mxu0 %v901
  %984 = vmatprep.mubr.f32.mxu0 %v915
  %985 = vmatmul.mubr.f32.gmra.mxu0 %v882
  %v986 = vpop.f32.mrf.mxu0
  %v987 = vadd.f32 %v913, %v986
  %v988 = vpop.f32.mrf.mxu0
  %989 = vmatprep.mubr.f32.mxu0 %v918
  %990 = vmatmul.mubr.f32.gmra.mxu0 %v883
  %v991 = vpop.f32.mrf.mxu0
  %v992 = vadd.f32 %v913, %v991
  %v993 = vpop.f32.mrf.mxu0
  %994 = vdwg.mxu0
  %v995 = vmax.f32 %v987, 0.0
  %v996 = vmax.f32 %v992, 0.0
  %v997 = vadd.f32 %v995, %v725
  %v998 = vadd.f32 %v996, %v726
  %vm999 = vcmp.ge.f32.partialorder %v997, 0.0
  %vm1000 = vcmp.ge.f32.partialorder %v998, 0.0
  %v1001 = vmul.f32 %v997, 0.22916667
  %v1002 = vmul.f32 %v998, 0.22916667
  %v1003 = vsel %vm999, %v997, %v1001
  %v1004 = vsel %vm1000, %v998, %v1002
  %v1005 = vrot.slane %v1003, 7
  %v1006 = vrot.slane %v1004, 7
  %v1007 = vsel %vm36, %v1005, %v1006
  %v1008 = vsel %vm36, %v1006, %v1005
  %v1009 = vmul.f32 %v1008, %v26
  %v1010 = vmul.f32 %v1007, %v27
  %v1011 = vrot.slane %v1003, 1
  %v1012 = vrot.slane %v1004, 1
  %v1013 = vsel %vm43, %v1011, %v1012
  %v1014 = vsel %vm43, %v1012, %v1011
  %v1015 = vmul.f32 %v1013, %v32
  %v1016 = vmul.f32 %v1014, %v33
  %1019 = vrot.lane.b32.xlu0 %v1003, 64
  %v1020 = vpop.permute.xlu0 %1019
  %1021 = vrot.lane.b32.xlu0 %v1004, 64
  %v1022 = vpop.permute.xlu0 %1021
  %v1025 = vsel %vm56, %v1009, %v1020
  %v1026 = vsel %vm56, %v1010, %v1022
  %s1027 = scalar_lea.vmem %s1, 1400
  %v1028 = vld [vmem:[%s1027] sm:$0xff]
  %v1029 = vld [vmem:[%s1027 + $0x8] sm:$0xff]
  %v1030 = vld [vmem:[%s1027 + $0x10] sm:$0xff]
  %v1031 = vld [vmem:[%s1027 + $0x18] sm:$0xff]
  %v1032 = vld [vmem:[%s1027 + $0x20] sm:$0xff]
  %v1033 = vld [vmem:[%s1027 + $0x28] sm:$0xff]
  %v1034 = vld [vmem:[%s1027 + $0x30] sm:$0xff]
  %v1035 = vld [vmem:[%s1027 + $0x38] sm:$0xff]
  %v1036 = vld [vmem:[%s1027 + $0x40] sm:$0xff]
  %v1037 = vld [vmem:[%s1027 + $0x48] sm:$0xff]
  %v1038 = vld [vmem:[%s1027 + $0x50] sm:$0xff]
  %v1039 = vld [vmem:[%s1027 + $0x58] sm:$0xff]
  %v1040 = vld [vmem:[%s1027 + $0x60] sm:$0xff]
  %v1041 = vld [vmem:[%s1027 + $0x68] sm:$0xff]
  %v1042 = vld [vmem:[%s1027 + $0x70] sm:$0xff]
  %v1043 = vld [vmem:[%s1027 + $0x78] sm:$0xff]
  %v1044 = vld [vmem:[%s1027 + $0x80] sm:$0xff]
  %v1045 = vld [vmem:[%s1027 + $0x88] sm:$0xff]
  %v1046 = vld [vmem:[%s1027 + $0x90] sm:$0xff]
  %v1047 = vld [vmem:[%s1027 + $0x98] sm:$0xff]
  %v1048 = vld [vmem:[%s1027 + $0xa0] sm:$0xff]
  %v1049 = vld [vmem:[%s1027 + $0xa8] sm:$0xff]
  %v1050 = vld [vmem:[%s1027 + $0xb0] sm:$0xff]
  %v1051 = vld [vmem:[%s1027 + $0xb8] sm:$0xff]
  %v1052 = vld [vmem:[%s1027 + $0xc0] sm:$0x1]
  %v1053 = vlaneseq
  %v1054 = vshrl.u32 %v1053, 7
  %v1055 = vsub.s32 0, %v1054
  %v1056 = vrot.slane %v1052, %v1055
  %v1058 = vsel %vm56, %v1015, 0
  %v1061 = vsel %vm56, %v1016, 0
  %1063 = vmatprep.subr.mxu0 0.0
  %1064 = vmatpush1.msra.mxu0 %v1043
  %1065 = vmatprep.subr.mxu0 0.0
  %1066 = vmatpush1.msra.mxu0 %v1042
  %1067 = vmatprep.subr.mxu0 0.0
  %1068 = vmatpush1.msra.mxu0 %v1041
  %1069 = vmatprep.subr.mxu0 0.0
  %1070 = vmatpush1.msra.mxu0 %v1040
  %1071 = vmatprep.subr.mxu0 0.0
  %1072 = vmatpush1.msra.mxu0 %v1039
  %1073 = vmatprep.subr.mxu0 0.0
  %1074 = vmatpush1.msra.mxu0 %v1038
  %1075 = vmatprep.subr.mxu0 0.0
  %1076 = vmatpush1.msra.mxu0 %v1037
  %1077 = vmatprep.subr.mxu0 0.0
  %1078 = vmatpush1.msra.mxu0 %v1036
  %1079 = vmatprep.subr.mxu0 0.0
  %1080 = vmatpush1.msra.mxu0 %v1035
  %1081 = vmatprep.subr.mxu0 0.0
  %1082 = vmatpush1.msra.mxu0 %v1034
  %1083 = vmatprep.subr.mxu0 0.0
  %1084 = vmatpush1.msra.mxu0 %v1033
  %1085 = vmatprep.subr.mxu0 0.0
  %1086 = vmatpush1.msra.mxu0 %v1032
  %1087 = vmatprep.subr.mxu0 0.0
  %1088 = vmatpush1.msra.mxu0 %v1031
  %1089 = vmatprep.subr.mxu0 0.0
  %1090 = vmatpush1.msra.mxu0 %v1030
  %1091 = vmatprep.subr.mxu0 0.0
  %1092 = vmatpush1.msra.mxu0 %v1029
  %1093 = vmatprep.subr.mxu0 0.0
  %1094 = vmatpush1.msra.mxu0 %v1028
  %1095 = vmatprep.subr.mxu0 0.0
  %1096 = vmatpush2.msra.mxu0 0.0
  %1097 = vmatprep.subr.mxu0 0.0
  %1098 = vmatpush2.msra.mxu0 0.0
  %1099 = vmatprep.subr.mxu0 0.0
  %1100 = vmatpush2.msra.mxu0 0.0
  %1101 = vmatprep.subr.mxu0 0.0
  %1102 = vmatpush2.msra.mxu0 0.0
  %1103 = vmatprep.subr.mxu0 0.0
  %1104 = vmatpush2.msra.mxu0 0.0
  %1105 = vmatprep.subr.mxu0 0.0
  %1106 = vmatpush2.msra.mxu0 0.0
  %1107 = vmatprep.subr.mxu0 0.0
  %1108 = vmatpush2.msra.mxu0 0.0
  %1109 = vmatprep.subr.mxu0 0.0
  %1110 = vmatpush2.msra.mxu0 0.0
  %1111 = vmatprep.subr.mxu0 0.0
  %1112 = vmatpush2.msra.mxu0 %v1051
  %1113 = vmatprep.subr.mxu0 0.0
  %1114 = vmatpush2.msra.mxu0 %v1050
  %1115 = vmatprep.subr.mxu0 0.0
  %1116 = vmatpush2.msra.mxu0 %v1049
  %1117 = vmatprep.subr.mxu0 0.0
  %1118 = vmatpush2.msra.mxu0 %v1048
  %1119 = vmatprep.subr.mxu0 0.0
  %1120 = vmatpush2.msra.mxu0 %v1047
  %1121 = vmatprep.subr.mxu0 0.0
  %1122 = vmatpush2.msra.mxu0 %v1046
  %1123 = vmatprep.subr.mxu0 0.0
  %1124 = vmatpush2.msra.mxu0 %v1045
  %1125 = vmatprep.subr.mxu0 0.0
  %1126 = vmatpush2.msra.mxu0 %v1044
  %1127 = vmatprep.mubr.f32.mxu0 %v1058
  %1128 = vmatmul.mubr.f32.gmra.mxu0 %v1025
  %v1129 = vpop.f32.mrf.mxu0
  %v1130 = vadd.f32 %v1056, %v1129
  %v1131 = vpop.f32.mrf.mxu0
  %1132 = vmatprep.mubr.f32.mxu0 %v1061
  %1133 = vmatmul.mubr.f32.gmra.mxu0 %v1026
  %v1134 = vpop.f32.mrf.mxu0
  %v1135 = vadd.f32 %v1056, %v1134
  %v1136 = vpop.f32.mrf.mxu0
  %1137 = vdwg.mxu0
  %v1138 = vmax.f32 %v1130, 0.0
  %v1139 = vmax.f32 %v1135, 0.0
  %v1140 = vrot.slane %v1138, 7
  %v1141 = vrot.slane %v1139, 7
  %v1142 = vsel %vm36, %v1140, %v1141
  %v1143 = vsel %vm36, %v1141, %v1140
  %v1144 = vmul.f32 %v1143, %v26
  %v1145 = vmul.f32 %v1142, %v27
  %v1146 = vrot.slane %v1138, 1
  %v1147 = vrot.slane %v1139, 1
  %v1148 = vsel %vm43, %v1146, %v1147
  %v1149 = vsel %vm43, %v1147, %v1146
  %v1150 = vmul.f32 %v1148, %v32
  %v1151 = vmul.f32 %v1149, %v33
  %1154 = vrot.lane.b32.xlu0 %v1138, 64
  %v1155 = vpop.permute.xlu0 %1154
  %1156 = vrot.lane.b32.xlu0 %v1139, 64
  %v1157 = vpop.permute.xlu0 %1156
  %v1160 = vsel %vm56, %v1144, %v1155
  %v1161 = vsel %vm56, %v1145, %v1157
  %s1162 = scalar_lea.vmem %s1, 1600
  %v1163 = vld [vmem:[%s1162] sm:$0xff]
  %v1164 = vld [vmem:[%s1162 + $0x8] sm:$0xff]
  %v1165 = vld [vmem:[%s1162 + $0x10] sm:$0xff]
  %v1166 = vld [vmem:[%s1162 + $0x18] sm:$0xff]
  %v1167 = vld [vmem:[%s1162 + $0x20] sm:$0xff]
  %v1168 = vld [vmem:[%s1162 + $0x28] sm:$0xff]
  %v1169 = vld [vmem:[%s1162 + $0x30] sm:$0xff]
  %v1170 = vld [vmem:[%s1162 + $0x38] sm:$0xff]
  %v1171 = vld [vmem:[%s1162 + $0x40] sm:$0xff]
  %v1172 = vld [vmem:[%s1162 + $0x48] sm:$0xff]
  %v1173 = vld [vmem:[%s1162 + $0x50] sm:$0xff]
  %v1174 = vld [vmem:[%s1162 + $0x58] sm:$0xff]
  %v1175 = vld [vmem:[%s1162 + $0x60] sm:$0xff]
  %v1176 = vld [vmem:[%s1162 + $0x68] sm:$0xff]
  %v1177 = vld [vmem:[%s1162 + $0x70] sm:$0xff]
  %v1178 = vld [vmem:[%s1162 + $0x78] sm:$0xff]
  %v1179 = vld [vmem:[%s1162 + $0x80] sm:$0xff]
  %v1180 = vld [vmem:[%s1162 + $0x88] sm:$0xff]
  %v1181 = vld [vmem:[%s1162 + $0x90] sm:$0xff]
  %v1182 = vld [vmem:[%s1162 + $0x98] sm:$0xff]
  %v1183 = vld [vmem:[%s1162 + $0xa0] sm:$0xff]
  %v1184 = vld [vmem:[%s1162 + $0xa8] sm:$0xff]
  %v1185 = vld [vmem:[%s1162 + $0xb0] sm:$0xff]
  %v1186 = vld [vmem:[%s1162 + $0xb8] sm:$0xff]
  %v1187 = vld [vmem:[%s1162 + $0xc0] sm:$0x1]
  %v1188 = vlaneseq
  %v1189 = vshrl.u32 %v1188, 7
  %v1190 = vsub.s32 0, %v1189
  %v1191 = vrot.slane %v1187, %v1190
  %v1193 = vsel %vm56, %v1150, 0
  %v1196 = vsel %vm56, %v1151, 0
  %1198 = vmatprep.subr.mxu0 0.0
  %1199 = vmatpush1.msra.mxu0 %v1178
  %1200 = vmatprep.subr.mxu0 0.0
  %1201 = vmatpush1.msra.mxu0 %v1177
  %1202 = vmatprep.subr.mxu0 0.0
  %1203 = vmatpush1.msra.mxu0 %v1176
  %1204 = vmatprep.subr.mxu0 0.0
  %1205 = vmatpush1.msra.mxu0 %v1175
  %1206 = vmatprep.subr.mxu0 0.0
  %1207 = vmatpush1.msra.mxu0 %v1174
  %1208 = vmatprep.subr.mxu0 0.0
  %1209 = vmatpush1.msra.mxu0 %v1173
  %1210 = vmatprep.subr.mxu0 0.0
  %1211 = vmatpush1.msra.mxu0 %v1172
  %1212 = vmatprep.subr.mxu0 0.0
  %1213 = vmatpush1.msra.mxu0 %v1171
  %1214 = vmatprep.subr.mxu0 0.0
  %1215 = vmatpush1.msra.mxu0 %v1170
  %1216 = vmatprep.subr.mxu0 0.0
  %1217 = vmatpush1.msra.mxu0 %v1169
  %1218 = vmatprep.subr.mxu0 0.0
  %1219 = vmatpush1.msra.mxu0 %v1168
  %1220 = vmatprep.subr.mxu0 0.0
  %1221 = vmatpush1.msra.mxu0 %v1167
  %1222 = vmatprep.subr.mxu0 0.0
  %1223 = vmatpush1.msra.mxu0 %v1166
  %1224 = vmatprep.subr.mxu0 0.0
  %1225 = vmatpush1.msra.mxu0 %v1165
  %1226 = vmatprep.subr.mxu0 0.0
  %1227 = vmatpush1.msra.mxu0 %v1164
  %1228 = vmatprep.subr.mxu0 0.0
  %1229 = vmatpush1.msra.mxu0 %v1163
  %1230 = vmatprep.subr.mxu0 0.0
  %1231 = vmatpush2.msra.mxu0 0.0
  %1232 = vmatprep.subr.mxu0 0.0
  %1233 = vmatpush2.msra.mxu0 0.0
  %1234 = vmatprep.subr.mxu0 0.0
  %1235 = vmatpush2.msra.mxu0 0.0
  %1236 = vmatprep.subr.mxu0 0.0
  %1237 = vmatpush2.msra.mxu0 0.0
  %1238 = vmatprep.subr.mxu0 0.0
  %1239 = vmatpush2.msra.mxu0 0.0
  %1240 = vmatprep.subr.mxu0 0.0
  %1241 = vmatpush2.msra.mxu0 0.0
  %1242 = vmatprep.subr.mxu0 0.0
  %1243 = vmatpush2.msra.mxu0 0.0
  %1244 = vmatprep.subr.mxu0 0.0
  %1245 = vmatpush2.msra.mxu0 0.0
  %1246 = vmatprep.subr.mxu0 0.0
  %1247 = vmatpush2.msra.mxu0 %v1186
  %1248 = vmatprep.subr.mxu0 0.0
  %1249 = vmatpush2.msra.mxu0 %v1185
  %1250 = vmatprep.subr.mxu0 0.0
  %1251 = vmatpush2.msra.mxu0 %v1184
  %1252 = vmatprep.subr.mxu0 0.0
  %1253 = vmatpush2.msra.mxu0 %v1183
  %1254 = vmatprep.subr.mxu0 0.0
  %1255 = vmatpush2.msra.mxu0 %v1182
  %1256 = vmatprep.subr.mxu0 0.0
  %1257 = vmatpush2.msra.mxu0 %v1181
  %1258 = vmatprep.subr.mxu0 0.0
  %1259 = vmatpush2.msra.mxu0 %v1180
  %1260 = vmatprep.subr.mxu0 0.0
  %1261 = vmatpush2.msra.mxu0 %v1179
  %1262 = vmatprep.mubr.f32.mxu0 %v1193
  %1263 = vmatmul.mubr.f32.gmra.mxu0 %v1160
  %v1264 = vpop.f32.mrf.mxu0
  %v1265 = vadd.f32 %v1191, %v1264
  %v1266 = vpop.f32.mrf.mxu0
  %1267 = vmatprep.mubr.f32.mxu0 %v1196
  %1268 = vmatmul.mubr.f32.gmra.mxu0 %v1161
  %v1269 = vpop.f32.mrf.mxu0
  %v1270 = vadd.f32 %v1191, %v1269
  %v1271 = vpop.f32.mrf.mxu0
  %1272 = vdwg.mxu0
  %v1273 = vmax.f32 %v1265, 0.0
  %v1274 = vmax.f32 %v1270, 0.0
  %v1275 = vadd.f32 %v1273, %v1003
  %v1276 = vadd.f32 %v1274, %v1004
  %vm1277 = vcmp.ge.f32.partialorder %v1275, 0.0
  %vm1278 = vcmp.ge.f32.partialorder %v1276, 0.0
  %v1279 = vmul.f32 %v1275, 0.22916667
  %v1280 = vmul.f32 %v1276, 0.22916667
  %v1281 = vsel %vm1277, %v1275, %v1279
  %v1282 = vsel %vm1278, %v1276, %v1280
  %v1283 = vadd.f32 %v1281, %v725
  %v1284 = vadd.f32 %v1282, %v726
  %v1285 = vrot.slane %v1283, 7
  %v1286 = vrot.slane %v1284, 7
  %v1287 = vsel %vm36, %v1285, %v1286
  %v1288 = vsel %vm36, %v1286, %v1285
  %v1289 = vmul.f32 %v1288, %v26
  %v1290 = vmul.f32 %v1287, %v27
  %v1291 = vrot.slane %v1283, 1
  %v1292 = vrot.slane %v1284, 1
  %v1293 = vsel %vm43, %v1291, %v1292
  %v1294 = vsel %vm43, %v1292, %v1291
  %v1295 = vmul.f32 %v1293, %v32
  %v1296 = vmul.f32 %v1294, %v33
  %1299 = vrot.lane.b32.xlu0 %v1283, 64
  %v1300 = vpop.permute.xlu0 %1299
  %1301 = vrot.lane.b32.xlu0 %v1284, 64
  %v1302 = vpop.permute.xlu0 %1301
  %v1305 = vsel %vm56, %v1289, %v1300
  %v1306 = vsel %vm56, %v1290, %v1302
  %s1307 = scalar_lea.vmem %s1, 1800
  %v1308 = vld [vmem:[%s1307] sm:$0xff]
  %v1309 = vld [vmem:[%s1307 + $0x8] sm:$0xff]
  %v1310 = vld [vmem:[%s1307 + $0x10] sm:$0xff]
  %v1311 = vld [vmem:[%s1307 + $0x18] sm:$0xff]
  %v1312 = vld [vmem:[%s1307 + $0x20] sm:$0xff]
  %v1313 = vld [vmem:[%s1307 + $0x28] sm:$0xff]
  %v1314 = vld [vmem:[%s1307 + $0x30] sm:$0xff]
  %v1315 = vld [vmem:[%s1307 + $0x38] sm:$0xff]
  %v1316 = vld [vmem:[%s1307 + $0x40] sm:$0xff]
  %v1317 = vld [vmem:[%s1307 + $0x48] sm:$0xff]
  %v1318 = vld [vmem:[%s1307 + $0x50] sm:$0xff]
  %v1319 = vld [vmem:[%s1307 + $0x58] sm:$0xff]
  %v1320 = vld [vmem:[%s1307 + $0x60] sm:$0xff]
  %v1321 = vld [vmem:[%s1307 + $0x68] sm:$0xff]
  %v1322 = vld [vmem:[%s1307 + $0x70] sm:$0xff]
  %v1323 = vld [vmem:[%s1307 + $0x78] sm:$0xff]
  %v1324 = vld [vmem:[%s1307 + $0x80] sm:$0xff]
  %v1325 = vld [vmem:[%s1307 + $0x88] sm:$0xff]
  %v1326 = vld [vmem:[%s1307 + $0x90] sm:$0xff]
  %v1327 = vld [vmem:[%s1307 + $0x98] sm:$0xff]
  %v1328 = vld [vmem:[%s1307 + $0xa0] sm:$0xff]
  %v1329 = vld [vmem:[%s1307 + $0xa8] sm:$0xff]
  %v1330 = vld [vmem:[%s1307 + $0xb0] sm:$0xff]
  %v1331 = vld [vmem:[%s1307 + $0xb8] sm:$0xff]
  %v1332 = vld [vmem:[%s1307 + $0xc0] sm:$0x1]
  %v1333 = vlaneseq
  %v1334 = vshrl.u32 %v1333, 7
  %v1335 = vsub.s32 0, %v1334
  %v1336 = vrot.slane %v1332, %v1335
  %v1338 = vsel %vm56, %v1295, 0
  %v1341 = vsel %vm56, %v1296, 0
  %1343 = vmatprep.subr.mxu0 0.0
  %1344 = vmatpush1.msra.mxu0 %v1323
  %1345 = vmatprep.subr.mxu0 0.0
  %1346 = vmatpush1.msra.mxu0 %v1322
  %1347 = vmatprep.subr.mxu0 0.0
  %1348 = vmatpush1.msra.mxu0 %v1321
  %1349 = vmatprep.subr.mxu0 0.0
  %1350 = vmatpush1.msra.mxu0 %v1320
  %1351 = vmatprep.subr.mxu0 0.0
  %1352 = vmatpush1.msra.mxu0 %v1319
  %1353 = vmatprep.subr.mxu0 0.0
  %1354 = vmatpush1.msra.mxu0 %v1318
  %1355 = vmatprep.subr.mxu0 0.0
  %1356 = vmatpush1.msra.mxu0 %v1317
  %1357 = vmatprep.subr.mxu0 0.0
  %1358 = vmatpush1.msra.mxu0 %v1316
  %1359 = vmatprep.subr.mxu0 0.0
  %1360 = vmatpush1.msra.mxu0 %v1315
  %1361 = vmatprep.subr.mxu0 0.0
  %1362 = vmatpush1.msra.mxu0 %v1314
  %1363 = vmatprep.subr.mxu0 0.0
  %1364 = vmatpush1.msra.mxu0 %v1313
  %1365 = vmatprep.subr.mxu0 0.0
  %1366 = vmatpush1.msra.mxu0 %v1312
  %1367 = vmatprep.subr.mxu0 0.0
  %1368 = vmatpush1.msra.mxu0 %v1311
  %1369 = vmatprep.subr.mxu0 0.0
  %1370 = vmatpush1.msra.mxu0 %v1310
  %1371 = vmatprep.subr.mxu0 0.0
  %1372 = vmatpush1.msra.mxu0 %v1309
  %1373 = vmatprep.subr.mxu0 0.0
  %1374 = vmatpush1.msra.mxu0 %v1308
  %1375 = vmatprep.subr.mxu0 0.0
  %1376 = vmatpush2.msra.mxu0 0.0
  %1377 = vmatprep.subr.mxu0 0.0
  %1378 = vmatpush2.msra.mxu0 0.0
  %1379 = vmatprep.subr.mxu0 0.0
  %1380 = vmatpush2.msra.mxu0 0.0
  %1381 = vmatprep.subr.mxu0 0.0
  %1382 = vmatpush2.msra.mxu0 0.0
  %1383 = vmatprep.subr.mxu0 0.0
  %1384 = vmatpush2.msra.mxu0 0.0
  %1385 = vmatprep.subr.mxu0 0.0
  %1386 = vmatpush2.msra.mxu0 0.0
  %1387 = vmatprep.subr.mxu0 0.0
  %1388 = vmatpush2.msra.mxu0 0.0
  %1389 = vmatprep.subr.mxu0 0.0
  %1390 = vmatpush2.msra.mxu0 0.0
  %1391 = vmatprep.subr.mxu0 0.0
  %1392 = vmatpush2.msra.mxu0 %v1331
  %1393 = vmatprep.subr.mxu0 0.0
  %1394 = vmatpush2.msra.mxu0 %v1330
  %1395 = vmatprep.subr.mxu0 0.0
  %1396 = vmatpush2.msra.mxu0 %v1329
  %1397 = vmatprep.subr.mxu0 0.0
  %1398 = vmatpush2.msra.mxu0 %v1328
  %1399 = vmatprep.subr.mxu0 0.0
  %1400 = vmatpush2.msra.mxu0 %v1327
  %1401 = vmatprep.subr.mxu0 0.0
  %1402 = vmatpush2.msra.mxu0 %v1326
  %1403 = vmatprep.subr.mxu0 0.0
  %1404 = vmatpush2.msra.mxu0 %v1325
  %1405 = vmatprep.subr.mxu0 0.0
  %1406 = vmatpush2.msra.mxu0 %v1324
  %1407 = vmatprep.mubr.f32.mxu0 %v1338
  %1408 = vmatmul.mubr.f32.gmra.mxu0 %v1305
  %v1409 = vpop.f32.mrf.mxu0
  %v1410 = vadd.f32 %v1336, %v1409
  %v1411 = vpop.f32.mrf.mxu0
  %1412 = vmatprep.mubr.f32.mxu0 %v1341
  %1413 = vmatmul.mubr.f32.gmra.mxu0 %v1306
  %v1414 = vpop.f32.mrf.mxu0
  %v1415 = vadd.f32 %v1336, %v1414
  %v1416 = vpop.f32.mrf.mxu0
  %1417 = vdwg.mxu0
  %v1418 = vmax.f32 %v1410, 0.0
  %v1419 = vmax.f32 %v1415, 0.0
  %v1420 = vrot.slane %v1418, 7
  %v1421 = vrot.slane %v1419, 7
  %v1422 = vsel %vm36, %v1420, %v1421
  %v1423 = vsel %vm36, %v1421, %v1420
  %v1424 = vmul.f32 %v1423, %v26
  %v1425 = vmul.f32 %v1422, %v27
  %v1426 = vrot.slane %v1418, 1
  %v1427 = vrot.slane %v1419, 1
  %v1428 = vsel %vm43, %v1426, %v1427
  %v1429 = vsel %vm43, %v1427, %v1426
  %v1430 = vmul.f32 %v1428, %v32
  %v1431 = vmul.f32 %v1429, %v33
  %1434 = vrot.lane.b32.xlu0 %v1418, 64
  %v1435 = vpop.permute.xlu0 %1434
  %1436 = vrot.lane.b32.xlu0 %v1419, 64
  %v1437 = vpop.permute.xlu0 %1436
  %v1440 = vsel %vm56, %v1424, %v1435
  %v1441 = vsel %vm56, %v1425, %v1437
  %s1442 = scalar_lea.vmem %s1, 2000
  %v1443 = vld [vmem:[%s1442] sm:$0xff]
  %v1444 = vld [vmem:[%s1442 + $0x8] sm:$0xff]
  %v1445 = vld [vmem:[%s1442 + $0x10] sm:$0xff]
  %v1446 = vld [vmem:[%s1442 + $0x18] sm:$0xff]
  %v1447 = vld [vmem:[%s1442 + $0x20] sm:$0xff]
  %v1448 = vld [vmem:[%s1442 + $0x28] sm:$0xff]
  %v1449 = vld [vmem:[%s1442 + $0x30] sm:$0xff]
  %v1450 = vld [vmem:[%s1442 + $0x38] sm:$0xff]
  %v1451 = vld [vmem:[%s1442 + $0x40] sm:$0xff]
  %v1452 = vld [vmem:[%s1442 + $0x48] sm:$0xff]
  %v1453 = vld [vmem:[%s1442 + $0x50] sm:$0xff]
  %v1454 = vld [vmem:[%s1442 + $0x58] sm:$0xff]
  %v1455 = vld [vmem:[%s1442 + $0x60] sm:$0xff]
  %v1456 = vld [vmem:[%s1442 + $0x68] sm:$0xff]
  %v1457 = vld [vmem:[%s1442 + $0x70] sm:$0xff]
  %v1458 = vld [vmem:[%s1442 + $0x78] sm:$0xff]
  %v1459 = vld [vmem:[%s1442 + $0x80] sm:$0xff]
  %v1460 = vld [vmem:[%s1442 + $0x88] sm:$0xff]
  %v1461 = vld [vmem:[%s1442 + $0x90] sm:$0xff]
  %v1462 = vld [vmem:[%s1442 + $0x98] sm:$0xff]
  %v1463 = vld [vmem:[%s1442 + $0xa0] sm:$0xff]
  %v1464 = vld [vmem:[%s1442 + $0xa8] sm:$0xff]
  %v1465 = vld [vmem:[%s1442 + $0xb0] sm:$0xff]
  %v1466 = vld [vmem:[%s1442 + $0xb8] sm:$0xff]
  %v1467 = vld [vmem:[%s1442 + $0xc0] sm:$0x1]
  %v1468 = vlaneseq
  %v1469 = vshrl.u32 %v1468, 7
  %v1470 = vsub.s32 0, %v1469
  %v1471 = vrot.slane %v1467, %v1470
  %v1473 = vsel %vm56, %v1430, 0
  %v1476 = vsel %vm56, %v1431, 0
  %1478 = vmatprep.subr.mxu0 0.0
  %1479 = vmatpush1.msra.mxu0 %v1458
  %1480 = vmatprep.subr.mxu0 0.0
  %1481 = vmatpush1.msra.mxu0 %v1457
  %1482 = vmatprep.subr.mxu0 0.0
  %1483 = vmatpush1.msra.mxu0 %v1456
  %1484 = vmatprep.subr.mxu0 0.0
  %1485 = vmatpush1.msra.mxu0 %v1455
  %1486 = vmatprep.subr.mxu0 0.0
  %1487 = vmatpush1.msra.mxu0 %v1454
  %1488 = vmatprep.subr.mxu0 0.0
  %1489 = vmatpush1.msra.mxu0 %v1453
  %1490 = vmatprep.subr.mxu0 0.0
  %1491 = vmatpush1.msra.mxu0 %v1452
  %1492 = vmatprep.subr.mxu0 0.0
  %1493 = vmatpush1.msra.mxu0 %v1451
  %1494 = vmatprep.subr.mxu0 0.0
  %1495 = vmatpush1.msra.mxu0 %v1450
  %1496 = vmatprep.subr.mxu0 0.0
  %1497 = vmatpush1.msra.mxu0 %v1449
  %1498 = vmatprep.subr.mxu0 0.0
  %1499 = vmatpush1.msra.mxu0 %v1448
  %1500 = vmatprep.subr.mxu0 0.0
  %1501 = vmatpush1.msra.mxu0 %v1447
  %1502 = vmatprep.subr.mxu0 0.0
  %1503 = vmatpush1.msra.mxu0 %v1446
  %1504 = vmatprep.subr.mxu0 0.0
  %1505 = vmatpush1.msra.mxu0 %v1445
  %1506 = vmatprep.subr.mxu0 0.0
  %1507 = vmatpush1.msra.mxu0 %v1444
  %1508 = vmatprep.subr.mxu0 0.0
  %1509 = vmatpush1.msra.mxu0 %v1443
  %1510 = vmatprep.subr.mxu0 0.0
  %1511 = vmatpush2.msra.mxu0 0.0
  %1512 = vmatprep.subr.mxu0 0.0
  %1513 = vmatpush2.msra.mxu0 0.0
  %1514 = vmatprep.subr.mxu0 0.0
  %1515 = vmatpush2.msra.mxu0 0.0
  %1516 = vmatprep.subr.mxu0 0.0
  %1517 = vmatpush2.msra.mxu0 0.0
  %1518 = vmatprep.subr.mxu0 0.0
  %1519 = vmatpush2.msra.mxu0 0.0
  %1520 = vmatprep.subr.mxu0 0.0
  %1521 = vmatpush2.msra.mxu0 0.0
  %1522 = vmatprep.subr.mxu0 0.0
  %1523 = vmatpush2.msra.mxu0 0.0
  %1524 = vmatprep.subr.mxu0 0.0
  %1525 = vmatpush2.msra.mxu0 0.0
  %1526 = vmatprep.subr.mxu0 0.0
  %1527 = vmatpush2.msra.mxu0 %v1466
  %1528 = vmatprep.subr.mxu0 0.0
  %1529 = vmatpush2.msra.mxu0 %v1465
  %1530 = vmatprep.subr.mxu0 0.0
  %1531 = vmatpush2.msra.mxu0 %v1464
  %1532 = vmatprep.subr.mxu0 0.0
  %1533 = vmatpush2.msra.mxu0 %v1463
  %1534 = vmatprep.subr.mxu0 0.0
  %1535 = vmatpush2.msra.mxu0 %v1462
  %1536 = vmatprep.subr.mxu0 0.0
  %1537 = vmatpush2.msra.mxu0 %v1461
  %1538 = vmatprep.subr.mxu0 0.0
  %1539 = vmatpush2.msra.mxu0 %v1460
  %1540 = vmatprep.subr.mxu0 0.0
  %1541 = vmatpush2.msra.mxu0 %v1459
  %1542 = vmatprep.mubr.f32.mxu0 %v1473
  %1543 = vmatmul.mubr.f32.gmra.mxu0 %v1440
  %v1544 = vpop.f32.mrf.mxu0
  %v1545 = vadd.f32 %v1471, %v1544
  %v1546 = vpop.f32.mrf.mxu0
  %1547 = vmatprep.mubr.f32.mxu0 %v1476
  %1548 = vmatmul.mubr.f32.gmra.mxu0 %v1441
  %v1549 = vpop.f32.mrf.mxu0
  %v1550 = vadd.f32 %v1471, %v1549
  %v1551 = vpop.f32.mrf.mxu0
  %1552 = vdwg.mxu0
  %v1553 = vmax.f32 %v1545, 0.0
  %v1554 = vmax.f32 %v1550, 0.0
  %v1555 = vadd.f32 %v1553, %v1283
  %v1556 = vadd.f32 %v1554, %v1284
  %vm1557 = vcmp.ge.f32.partialorder %v1555, 0.0
  %vm1558 = vcmp.ge.f32.partialorder %v1556, 0.0
  %v1559 = vmul.f32 %v1555, 0.22916667
  %v1560 = vmul.f32 %v1556, 0.22916667
  %v1561 = vsel %vm1557, %v1555, %v1559
  %v1562 = vsel %vm1558, %v1556, %v1560
  %v1563 = vrot.slane %v1561, 7
  %v1564 = vrot.slane %v1562, 7
  %v1565 = vsel %vm36, %v1563, %v1564
  %v1566 = vsel %vm36, %v1564, %v1563
  %v1567 = vmul.f32 %v1566, %v26
  %v1568 = vmul.f32 %v1565, %v27
  %v1569 = vrot.slane %v1561, 1
  %v1570 = vrot.slane %v1562, 1
  %v1571 = vsel %vm43, %v1569, %v1570
  %v1572 = vsel %vm43, %v1570, %v1569
  %v1573 = vmul.f32 %v1571, %v32
  %v1574 = vmul.f32 %v1572, %v33
  %1577 = vrot.lane.b32.xlu0 %v1561, 64
  %v1578 = vpop.permute.xlu0 %1577
  %1579 = vrot.lane.b32.xlu0 %v1562, 64
  %v1580 = vpop.permute.xlu0 %1579
  %v1583 = vsel %vm56, %v1567, %v1578
  %v1584 = vsel %vm56, %v1568, %v1580
  %s1585 = scalar_lea.vmem %s1, 2200
  %v1586 = vld [vmem:[%s1585] sm:$0xff]
  %v1587 = vld [vmem:[%s1585 + $0x8] sm:$0xff]
  %v1588 = vld [vmem:[%s1585 + $0x10] sm:$0xff]
  %v1589 = vld [vmem:[%s1585 + $0x18] sm:$0xff]
  %v1590 = vld [vmem:[%s1585 + $0x20] sm:$0xff]
  %v1591 = vld [vmem:[%s1585 + $0x28] sm:$0xff]
  %v1592 = vld [vmem:[%s1585 + $0x30] sm:$0xff]
  %v1593 = vld [vmem:[%s1585 + $0x38] sm:$0xff]
  %v1594 = vld [vmem:[%s1585 + $0x40] sm:$0xff]
  %v1595 = vld [vmem:[%s1585 + $0x48] sm:$0xff]
  %v1596 = vld [vmem:[%s1585 + $0x50] sm:$0xff]
  %v1597 = vld [vmem:[%s1585 + $0x58] sm:$0xff]
  %v1598 = vld [vmem:[%s1585 + $0x60] sm:$0xff]
  %v1599 = vld [vmem:[%s1585 + $0x68] sm:$0xff]
  %v1600 = vld [vmem:[%s1585 + $0x70] sm:$0xff]
  %v1601 = vld [vmem:[%s1585 + $0x78] sm:$0xff]
  %v1602 = vld [vmem:[%s1585 + $0x80] sm:$0xff]
  %v1603 = vld [vmem:[%s1585 + $0x88] sm:$0xff]
  %v1604 = vld [vmem:[%s1585 + $0x90] sm:$0xff]
  %v1605 = vld [vmem:[%s1585 + $0x98] sm:$0xff]
  %v1606 = vld [vmem:[%s1585 + $0xa0] sm:$0xff]
  %v1607 = vld [vmem:[%s1585 + $0xa8] sm:$0xff]
  %v1608 = vld [vmem:[%s1585 + $0xb0] sm:$0xff]
  %v1609 = vld [vmem:[%s1585 + $0xb8] sm:$0xff]
  %v1610 = vld [vmem:[%s1585 + $0xc0] sm:$0x1]
  %v1611 = vlaneseq
  %v1612 = vshrl.u32 %v1611, 7
  %v1613 = vsub.s32 0, %v1612
  %v1614 = vrot.slane %v1610, %v1613
  %v1616 = vsel %vm56, %v1573, 0
  %v1619 = vsel %vm56, %v1574, 0
  %1621 = vmatprep.subr.mxu0 0.0
  %1622 = vmatpush1.msra.mxu0 %v1601
  %1623 = vmatprep.subr.mxu0 0.0
  %1624 = vmatpush1.msra.mxu0 %v1600
  %1625 = vmatprep.subr.mxu0 0.0
  %1626 = vmatpush1.msra.mxu0 %v1599
  %1627 = vmatprep.subr.mxu0 0.0
  %1628 = vmatpush1.msra.mxu0 %v1598
  %1629 = vmatprep.subr.mxu0 0.0
  %1630 = vmatpush1.msra.mxu0 %v1597
  %1631 = vmatprep.subr.mxu0 0.0
  %1632 = vmatpush1.msra.mxu0 %v1596
  %1633 = vmatprep.subr.mxu0 0.0
  %1634 = vmatpush1.msra.mxu0 %v1595
  %1635 = vmatprep.subr.mxu0 0.0
  %1636 = vmatpush1.msra.mxu0 %v1594
  %1637 = vmatprep.subr.mxu0 0.0
  %1638 = vmatpush1.msra.mxu0 %v1593
  %1639 = vmatprep.subr.mxu0 0.0
  %1640 = vmatpush1.msra.mxu0 %v1592
  %1641 = vmatprep.subr.mxu0 0.0
  %1642 = vmatpush1.msra.mxu0 %v1591
  %1643 = vmatprep.subr.mxu0 0.0
  %1644 = vmatpush1.msra.mxu0 %v1590
  %1645 = vmatprep.subr.mxu0 0.0
  %1646 = vmatpush1.msra.mxu0 %v1589
  %1647 = vmatprep.subr.mxu0 0.0
  %1648 = vmatpush1.msra.mxu0 %v1588
  %1649 = vmatprep.subr.mxu0 0.0
  %1650 = vmatpush1.msra.mxu0 %v1587
  %1651 = vmatprep.subr.mxu0 0.0
  %1652 = vmatpush1.msra.mxu0 %v1586
  %1653 = vmatprep.subr.mxu0 0.0
  %1654 = vmatpush2.msra.mxu0 0.0
  %1655 = vmatprep.subr.mxu0 0.0
  %1656 = vmatpush2.msra.mxu0 0.0
  %1657 = vmatprep.subr.mxu0 0.0
  %1658 = vmatpush2.msra.mxu0 0.0
  %1659 = vmatprep.subr.mxu0 0.0
  %1660 = vmatpush2.msra.mxu0 0.0
  %1661 = vmatprep.subr.mxu0 0.0
  %1662 = vmatpush2.msra.mxu0 0.0
  %1663 = vmatprep.subr.mxu0 0.0
  %1664 = vmatpush2.msra.mxu0 0.0
  %1665 = vmatprep.subr.mxu0 0.0
  %1666 = vmatpush2.msra.mxu0 0.0
  %1667 = vmatprep.subr.mxu0 0.0
  %1668 = vmatpush2.msra.mxu0 0.0
  %1669 = vmatprep.subr.mxu0 0.0
  %1670 = vmatpush2.msra.mxu0 %v1609
  %1671 = vmatprep.subr.mxu0 0.0
  %1672 = vmatpush2.msra.mxu0 %v1608
  %1673 = vmatprep.subr.mxu0 0.0
  %1674 = vmatpush2.msra.mxu0 %v1607
  %1675 = vmatprep.subr.mxu0 0.0
  %1676 = vmatpush2.msra.mxu0 %v1606
  %1677 = vmatprep.subr.mxu0 0.0
  %1678 = vmatpush2.msra.mxu0 %v1605
  %1679 = vmatprep.subr.mxu0 0.0
  %1680 = vmatpush2.msra.mxu0 %v1604
  %1681 = vmatprep.subr.mxu0 0.0
  %1682 = vmatpush2.msra.mxu0 %v1603
  %1683 = vmatprep.subr.mxu0 0.0
  %1684 = vmatpush2.msra.mxu0 %v1602
  %1685 = vmatprep.mubr.f32.mxu0 %v1616
  %1686 = vmatmul.mubr.f32.gmra.mxu0 %v1583
  %v1687 = vpop.f32.mrf.mxu0
  %v1688 = vadd.f32 %v1614, %v1687
  %v1689 = vpop.f32.mrf.mxu0
  %1690 = vmatprep.mubr.f32.mxu0 %v1619
  %1691 = vmatmul.mubr.f32.gmra.mxu0 %v1584
  %v1692 = vpop.f32.mrf.mxu0
  %v1693 = vadd.f32 %v1614, %v1692
  %v1694 = vpop.f32.mrf.mxu0
  %1695 = vdwg.mxu0
  %v1696 = vmax.f32 %v1688, 0.0
  %v1697 = vmax.f32 %v1693, 0.0
  %v1698 = vrot.slane %v1696, 7
  %v1699 = vrot.slane %v1697, 7
  %v1700 = vsel %vm36, %v1698, %v1699
  %v1701 = vsel %vm36, %v1699, %v1698
  %v1702 = vmul.f32 %v1701, %v26
  %v1703 = vmul.f32 %v1700, %v27
  %v1704 = vrot.slane %v1696, 1
  %v1705 = vrot.slane %v1697, 1
  %v1706 = vsel %vm43, %v1704, %v1705
  %v1707 = vsel %vm43, %v1705, %v1704
  %v1708 = vmul.f32 %v1706, %v32
  %v1709 = vmul.f32 %v1707, %v33
  %1712 = vrot.lane.b32.xlu0 %v1696, 64
  %v1713 = vpop.permute.xlu0 %1712
  %1714 = vrot.lane.b32.xlu0 %v1697, 64
  %v1715 = vpop.permute.xlu0 %1714
  %v1718 = vsel %vm56, %v1702, %v1713
  %v1719 = vsel %vm56, %v1703, %v1715
  %s1720 = scalar_lea.vmem %s1, 2400
  %v1721 = vld [vmem:[%s1720] sm:$0xff]
  %v1722 = vld [vmem:[%s1720 + $0x8] sm:$0xff]
  %v1723 = vld [vmem:[%s1720 + $0x10] sm:$0xff]
  %v1724 = vld [vmem:[%s1720 + $0x18] sm:$0xff]
  %v1725 = vld [vmem:[%s1720 + $0x20] sm:$0xff]
  %v1726 = vld [vmem:[%s1720 + $0x28] sm:$0xff]
  %v1727 = vld [vmem:[%s1720 + $0x30] sm:$0xff]
  %v1728 = vld [vmem:[%s1720 + $0x38] sm:$0xff]
  %v1729 = vld [vmem:[%s1720 + $0x40] sm:$0xff]
  %v1730 = vld [vmem:[%s1720 + $0x48] sm:$0xff]
  %v1731 = vld [vmem:[%s1720 + $0x50] sm:$0xff]
  %v1732 = vld [vmem:[%s1720 + $0x58] sm:$0xff]
  %v1733 = vld [vmem:[%s1720 + $0x60] sm:$0xff]
  %v1734 = vld [vmem:[%s1720 + $0x68] sm:$0xff]
  %v1735 = vld [vmem:[%s1720 + $0x70] sm:$0xff]
  %v1736 = vld [vmem:[%s1720 + $0x78] sm:$0xff]
  %v1737 = vld [vmem:[%s1720 + $0x80] sm:$0xff]
  %v1738 = vld [vmem:[%s1720 + $0x88] sm:$0xff]
  %v1739 = vld [vmem:[%s1720 + $0x90] sm:$0xff]
  %v1740 = vld [vmem:[%s1720 + $0x98] sm:$0xff]
  %v1741 = vld [vmem:[%s1720 + $0xa0] sm:$0xff]
  %v1742 = vld [vmem:[%s1720 + $0xa8] sm:$0xff]
  %v1743 = vld [vmem:[%s1720 + $0xb0] sm:$0xff]
  %v1744 = vld [vmem:[%s1720 + $0xb8] sm:$0xff]
  %v1745 = vld [vmem:[%s1720 + $0xc0] sm:$0x1]
  %v1746 = vlaneseq
  %v1747 = vshrl.u32 %v1746, 7
  %v1748 = vsub.s32 0, %v1747
  %v1749 = vrot.slane %v1745, %v1748
  %v1751 = vsel %vm56, %v1708, 0
  %v1754 = vsel %vm56, %v1709, 0
  %1756 = vmatprep.subr.mxu0 0.0
  %1757 = vmatpush1.msra.mxu0 %v1736
  %1758 = vmatprep.subr.mxu0 0.0
  %1759 = vmatpush1.msra.mxu0 %v1735
  %1760 = vmatprep.subr.mxu0 0.0
  %1761 = vmatpush1.msra.mxu0 %v1734
  %1762 = vmatprep.subr.mxu0 0.0
  %1763 = vmatpush1.msra.mxu0 %v1733
  %1764 = vmatprep.subr.mxu0 0.0
  %1765 = vmatpush1.msra.mxu0 %v1732
  %1766 = vmatprep.subr.mxu0 0.0
  %1767 = vmatpush1.msra.mxu0 %v1731
  %1768 = vmatprep.subr.mxu0 0.0
  %1769 = vmatpush1.msra.mxu0 %v1730
  %1770 = vmatprep.subr.mxu0 0.0
  %1771 = vmatpush1.msra.mxu0 %v1729
  %1772 = vmatprep.subr.mxu0 0.0
  %1773 = vmatpush1.msra.mxu0 %v1728
  %1774 = vmatprep.subr.mxu0 0.0
  %1775 = vmatpush1.msra.mxu0 %v1727
  %1776 = vmatprep.subr.mxu0 0.0
  %1777 = vmatpush1.msra.mxu0 %v1726
  %1778 = vmatprep.subr.mxu0 0.0
  %1779 = vmatpush1.msra.mxu0 %v1725
  %1780 = vmatprep.subr.mxu0 0.0
  %1781 = vmatpush1.msra.mxu0 %v1724
  %1782 = vmatprep.subr.mxu0 0.0
  %1783 = vmatpush1.msra.mxu0 %v1723
  %1784 = vmatprep.subr.mxu0 0.0
  %1785 = vmatpush1.msra.mxu0 %v1722
  %1786 = vmatprep.subr.mxu0 0.0
  %1787 = vmatpush1.msra.mxu0 %v1721
  %1788 = vmatprep.subr.mxu0 0.0
  %1789 = vmatpush2.msra.mxu0 0.0
  %1790 = vmatprep.subr.mxu0 0.0
  %1791 = vmatpush2.msra.mxu0 0.0
  %1792 = vmatprep.subr.mxu0 0.0
  %1793 = vmatpush2.msra.mxu0 0.0
  %1794 = vmatprep.subr.mxu0 0.0
  %1795 = vmatpush2.msra.mxu0 0.0
  %1796 = vmatprep.subr.mxu0 0.0
  %1797 = vmatpush2.msra.mxu0 0.0
  %1798 = vmatprep.subr.mxu0 0.0
  %1799 = vmatpush2.msra.mxu0 0.0
  %1800 = vmatprep.subr.mxu0 0.0
  %1801 = vmatpush2.msra.mxu0 0.0
  %1802 = vmatprep.subr.mxu0 0.0
  %1803 = vmatpush2.msra.mxu0 0.0
  %1804 = vmatprep.subr.mxu0 0.0
  %1805 = vmatpush2.msra.mxu0 %v1744
  %1806 = vmatprep.subr.mxu0 0.0
  %1807 = vmatpush2.msra.mxu0 %v1743
  %1808 = vmatprep.subr.mxu0 0.0
  %1809 = vmatpush2.msra.mxu0 %v1742
  %1810 = vmatprep.subr.mxu0 0.0
  %1811 = vmatpush2.msra.mxu0 %v1741
  %1812 = vmatprep.subr.mxu0 0.0
  %1813 = vmatpush2.msra.mxu0 %v1740
  %1814 = vmatprep.subr.mxu0 0.0
  %1815 = vmatpush2.msra.mxu0 %v1739
  %1816 = vmatprep.subr.mxu0 0.0
  %1817 = vmatpush2.msra.mxu0 %v1738
  %1818 = vmatprep.subr.mxu0 0.0
  %1819 = vmatpush2.msra.mxu0 %v1737
  %1820 = vmatprep.mubr.f32.mxu0 %v1751
  %1821 = vmatmul.mubr.f32.gmra.mxu0 %v1718
  %v1822 = vpop.f32.mrf.mxu0
  %v1823 = vadd.f32 %v1749, %v1822
  %v1824 = vpop.f32.mrf.mxu0
  %1825 = vmatprep.mubr.f32.mxu0 %v1754
  %1826 = vmatmul.mubr.f32.gmra.mxu0 %v1719
  %v1827 = vpop.f32.mrf.mxu0
  %v1828 = vadd.f32 %v1749, %v1827
  %v1829 = vpop.f32.mrf.mxu0
  %1830 = vdwg.mxu0
  %v1831 = vmax.f32 %v1823, 0.0
  %v1832 = vmax.f32 %v1828, 0.0
  %v1833 = vadd.f32 %v1831, %v1561
  %v1834 = vadd.f32 %v1832, %v1562
  %vm1835 = vcmp.ge.f32.partialorder %v1833, 0.0
  %vm1836 = vcmp.ge.f32.partialorder %v1834, 0.0
  %v1837 = vmul.f32 %v1833, 0.22916667
  %v1838 = vmul.f32 %v1834, 0.22916667
  %v1839 = vsel %vm1835, %v1833, %v1837
  %v1840 = vsel %vm1836, %v1834, %v1838
  %v1841 = vadd.f32 %v1839, %v1283
  %v1842 = vadd.f32 %v1840, %v1284
  %v1843 = vsel %vm56, %v1841, 0.0
  %v1844 = vsel %vm56, %v1842, 0.0
  %v1845 = vadd.f32 %v1843, %v1844
  %v1846 = vrot.slane %v1845, 4
  %v1847 = vadd.f32 %v1845, %v1846
  %v1848 = vrot.slane %v1847, 2
  %v1849 = vadd.f32 %v1847, %v1848
  %v1850 = vrot.slane %v1849, 1
  %v1851 = vadd.f32 %v1849, %v1850
  %v1852 = vrcp.pop 16.0
  %v1853 = vmul.f32 %v1851, %v1852
  %v1854 = vld [vmem:[%s2] sm:$0xff]
  %v1855 = vmul.f32 %v1854, %v1853
  %v1856 = vsel %vm56, %v1855, 0.0
  %1857 = vadd.xlane.f32.xlu0 %v1856
  %v1858 = vpop.xlane.xlu0 %1857
  %v1859 = vld [vmem:[%s3] sm:$0xff]
  %v1860 = vadd.f32 %v1858, %v1859
  %vm1861 = vcmask 7168
  %v1862 = vsel %vm1861, %v1860, -inf
  %v1863 = vrot.slane %v1862, 4
  %v1864 = vmax.f32 %v1862, %v1863
  %v1865 = vrot.slane %v1864, 2
  %v1866 = vmax.f32 %v1864, %v1865
  %v1867 = vrot.slane %v1866, 1
  %v1868 = vmax.f32 %v1866, %v1867
  %v1869 = vsub.f32 %v1860, %v1868
  %v1870 = vmul.f32 %v1869, 1.442695
  %v1871 = vpow.pop %v1870
  %v1872 = vsel %vm1861, %v1871, 0.0
  %v1873 = vrot.slane %v1872, 4
  %v1874 = vadd.f32 %v1872, %v1873
  %v1875 = vrot.slane %v1874, 2
  %v1876 = vadd.f32 %v1874, %v1875
  %v1877 = vrot.slane %v1876, 1
  %v1878 = vadd.f32 %v1876, %v1877
  %v1879 = vrcp.pop %v1878
  %v1880 = vmul.f32 %v1871, %v1879
  %1881 = vst.msk [vmem:[%s4] sm:$0xff] %vm1861, %v1880
  // Predicated region
  $region18: #{tpu_custom_call.1} parent=0 // pred_check
    _
  $region19: #{tpu_custom_call.1} parent=0 // pred_check_branch
    %1883 = sbr.rel (0) target = $region21
  $region20: #{tpu_custom_call.1} parent=0 // pred_region
    _
  $region21: #{tpu_custom_call.1} parent=0 // pred_fallthru
    _
  // Predicated region
  $region22: #{tpu_custom_call.1} parent=0 // pred_check
    _
  $region23: #{tpu_custom_call.1} parent=0 // pred_check_branch
    %1885 = sbr.rel (0) target = $region25
  $region24: #{tpu_custom_call.1} parent=0 // pred_region
    _
  $region25: #{tpu_custom_call.1} parent=0 // pred_fallthru
    _

</llo_original>
